<compile_context>
chip_gen: v6e
topology: v6e:2x2x1
jax: 0.10.0
libtpu: 0.0.40
codegen_flags: <defaults>
</compile_context>

<pallas_src>
import functools

import jax
import jax.numpy as jnp
import numpy as np
from jax.experimental import pallas as pl
from jax.experimental.pallas import tpu as pltpu

_EPS = 1e-5
_LANE = 128


# ------------------------------ Pallas kernel ------------------------------ #

def _fused_basic_block_kernel(n, h,
                              x_ref, w1_ref, w2_ref,
                              g1_ref, b1_ref, g2_ref, b2_ref,
                              out_ref):
    """conv1+bn1+relu+conv2+bn2+residual+relu, fully fused, one invocation.

    Layouts (all f32, batch folded into the sublane/M axis, channels padded to
    CP = multiple of 128):
      x_ref  : (N*H, CP)    x_ref[n*H + h, c] = x[n, c, h, 0]   (also the residual)
      w*_ref : (3, CP, CP)  per-H-tap conv weights, shared over the batch
      g*/b*  : (1, CP)      BN affine params (zero in padded lanes)
      out_ref: (N*H, 3*CP)  the 3 unique W columns [col_a | col_b | col_c],
                            lane-dense; the 5-wide mirror happens in the wrapper.
    """
    f32 = jnp.float32
    nh, cp = x_ref.shape

    # Per-image H-boundary masks (iota compare; pure VPU work, no extra inputs).
    row = jax.lax.broadcasted_iota(jnp.int32, (nh, cp), 0) % h
    is_first = row == 0
    is_last = row == (h - 1)
    first_f = is_first.astype(f32)
    last_f = is_last.astype(f32)

    def shift_dn(z):
        # z[r-1]; zero on the first row of every image (H zero-padding row).
        return jnp.where(is_first, 0.0, pltpu.roll(z, 1, 0))

    def shift_up(z):
        # z[r+1]; zero on the last row of every image.
        return jnp.where(is_last, 0.0, pltpu.roll(z, nh - 1, 0))

    def conv3_h(z, w_ref):
        # 3x1 conv over H with padding=1: XLU roll + mask for the +-1 taps,
        # one shared-weight MXU matmul per tap.
        return (jnp.dot(shift_dn(z), w_ref[0], preferred_element_type=f32)
                + jnp.dot(z, w_ref[1], preferred_element_type=f32)
                + jnp.dot(shift_up(z), w_ref[2], preferred_element_type=f32))

    def bn_scale_shift(y_sum, ysq_sum, count, g, b):
        # Training-mode BatchNorm folded into one scale/shift FMA; single-pass
        # biased variance, clamped against cancellation going negative.
        inv = 1.0 / count
        mu = y_sum * inv
        var = jnp.maximum(ysq_sum * inv - mu * mu, 0.0)
        scale = g * jax.lax.rsqrt(var + _EPS)
        return scale, b - mu * scale

    x = x_ref[...]                                    # (NH, CP), also the residual

    # ---- conv1 + bn1 + relu -------------------------------------------------
    # conv1 output W columns are [0, y1, 0]: side columns come from W padding.
    y1 = conv3_h(x, w1_ref)
    cnt1 = 3.0 * n * h
    scale1, shift1 = bn_scale_shift(jnp.sum(y1, axis=0, keepdims=True),
                                    jnp.sum(y1 * y1, axis=0, keepdims=True),
                                    cnt1, g1_ref[...], b1_ref[...])
    zc = jnp.maximum(y1 * scale1 + shift1, 0.0)       # centre column (NH, CP)
    z0 = jnp.maximum(shift1, 0.0)                     # side columns = relu(bn(0)), (1, CP)

    # ---- conv2 --------------------------------------------------------------
    # conv2 output W columns are [0, d1, d2, d1, 0].
    d2 = conv3_h(zc, w2_ref)
    # z0 is constant over H: interior rows see z0 @ (w0+w1+w2); first/last rows
    # of each image are missing the h-1 / h+1 tap respectively (edge fixup).
    a_full = jnp.dot(z0, w2_ref[0] + w2_ref[1] + w2_ref[2],
                     preferred_element_type=f32)                       # (1, CP)
    c_dn = jnp.dot(z0, w2_ref[0], preferred_element_type=f32)          # (1, CP)
    c_up = jnp.dot(z0, w2_ref[2], preferred_element_type=f32)          # (1, CP)
    d1 = a_full - first_f * c_dn - last_f * c_up                       # (NH, CP)

    # ---- bn2 + residual + relu ---------------------------------------------
    cnt2 = 5.0 * n * h
    s2 = jnp.sum(d2, axis=0, keepdims=True) + 2.0 * jnp.sum(d1, axis=0, keepdims=True)
    q2 = (jnp.sum(d2 * d2, axis=0, keepdims=True)
          + 2.0 * jnp.sum(d1 * d1, axis=0, keepdims=True))
    scale2, shift2 = bn_scale_shift(s2, q2, cnt2, g2_ref[...], b2_ref[...])

    # Residual `out += identity` broadcasts the (W_in == 1) input over all 5 W columns.
    col_a = jnp.maximum(shift2 + x, 0.0)                  # W = 0, 4 (conv2 out is 0)
    col_b = jnp.maximum(d1 * scale2 + shift2 + x, 0.0)    # W = 1, 3
    col_c = jnp.maximum(d2 * scale2 + shift2 + x, 0.0)    # W = 2
    # Lane-dense, 128-aligned, unmasked full-width stores.
    out_ref[:, 0 * cp:1 * cp] = col_a
    out_ref[:, 1 * cp:2 * cp] = col_b
    out_ref[:, 2 * cp:3 * cp] = col_c


# ------------------------------- JAX wrapper -------------------------------- #

def basic_block_forward(x_nchw, params):
    w1, g1, b1 = params["w1"], params["g1"], params["b1"]
    w2, g2, b2 = params["w2"], params["g2"], params["b2"]
    n, cin, h, w_in = x_nchw.shape
    planes = w1.shape[0]
    if w_in != 1:
        raise ValueError("residual broadcast (as in the PyTorch module) requires W == 1")
    if cin != planes:
        raise ValueError("identity residual requires inplanes == planes (no downsample)")

    f32 = jnp.float32
    cp = ((max(cin, planes) + _LANE - 1) // _LANE) * _LANE      # pad channels to lanes
    nh = n * h

    # (N, C, H, 1) -> (N*H, C) -> pad channel lanes to CP.
    x2d = jnp.transpose(x_nchw[:, :, :, 0].astype(f32), (0, 2, 1)).reshape(nh, cin)
    x2d = jnp.pad(x2d, ((0, 0), (0, cp - cin)))

    # (P, C, 3, 1) -> (3, C, P), zero-padded to (3, CP, CP).  Shared over batch.
    def prep_w(w):
        wt = jnp.transpose(w[:, :, :, 0].astype(f32), (2, 1, 0))
        return jnp.pad(wt, ((0, 0), (0, cp - wt.shape[1]), (0, cp - wt.shape[2])))

    def prep_v(v):
        return jnp.pad(v.astype(f32), (0, cp - v.shape[0])).reshape(1, cp)

    out2d = pl.pallas_call(
        functools.partial(_fused_basic_block_kernel, n, h),
        out_shape=jax.ShapeDtypeStruct((nh, 3 * cp), jnp.float32),
        in_specs=[pl.BlockSpec(memory_space=pltpu.MemorySpace.VMEM)] * 7,
        out_specs=pl.BlockSpec(memory_space=pltpu.MemorySpace.VMEM),
        compiler_params=pltpu.CompilerParams(vmem_limit_bytes=32 * 1024 * 1024),
    )(x2d, prep_w(w1), prep_w(w2),
      prep_v(g1), prep_v(b1), prep_v(g2), prep_v(b2))

    # (N*H, 3*CP) -> (N, P, H, 3) -> mirror W columns to (N, P, H, 5) (NCHW).
    cols = out2d.reshape(n, h, 3, cp)[..., :planes]             # (N, H, 3, P)
    cols = jnp.transpose(cols, (0, 3, 1, 2))                    # (N, P, H, 3)
    a, b, c = cols[..., 0], cols[..., 1], cols[..., 2]
    return jnp.stack([a, b, c, b, a], axis=-1)                  # (N, P, H, 5)


# --------------------------- pure-JAX reference ----------------------------- #

def _reference_forward(x, params):
    def conv(y, wgt):
        return jax.lax.conv_general_dilated(
            y, wgt, window_strides=(1, 1), padding=((1, 1), (1, 1)),
            dimension_numbers=("NCHW", "OIHW", "NCHW"))

    def bn(y, g, b):
        mu = jnp.mean(y, axis=(0, 2, 3), keepdims=True)
        var = jnp.mean(jnp.square(y - mu), axis=(0, 2, 3), keepdims=True)
        return (y - mu) * jax.lax.rsqrt(var + _EPS) * g.reshape(1, -1, 1, 1) \
            + b.reshape(1, -1, 1, 1)

    o = jax.nn.relu(bn(conv(x, params["w1"]), params["g1"], params["b1"]))
    o = bn(conv(o, params["w2"]), params["g2"], params["b2"])
    return jax.nn.relu(o + x)


# ---------------------------------- main ------------------------------------ #

if __name__ == "__main__":
    inplanes = planes = 4
    key = jax.random.PRNGKey(0)
    kx, kw1, kw2, kg1, kb1, kg2, kb2 = jax.random.split(key, 7)

    params = {
        "w1": 0.3 * jax.random.normal(kw1, (planes, inplanes, 3, 1), jnp.float32),
        "g1": 1.0 + 0.1 * jax.random.normal(kg1, (planes,), jnp.float32),
        "b1": 0.1 * jax.random.normal(kb1, (planes,), jnp.float32),
        "w2": 0.3 * jax.random.normal(kw2, (planes, planes, 3, 1), jnp.float32),
        "g2": 1.0 + 0.1 * jax.random.normal(kg2, (planes,), jnp.float32),
        "b2": 0.1 * jax.random.normal(kb2, (planes,), jnp.float32),
    }

    # NCHW input.  W must be 1 for the residual broadcast to be valid, exactly
    # as in the PyTorch module (each (3,1) conv with padding=1 grows W by 2).
    x = jax.random.normal(kx, (2, inplanes, 16, 1), jnp.float32)

    fwd = jax.jit(basic_block_forward)
    ref_fwd = jax.jit(_reference_forward)

    out = jax.block_until_ready(fwd(x, params))
    ref = jax.block_until_ready(ref_fwd(x, params))

    assert out.shape == ref.shape == (2, planes, 16, 5), (out.shape, ref.shape)
    # Tolerance sized for TPU default matmul precision (bf16 operands, f32 acc)
    # in both the kernel and the reference conv.
    np.testing.assert_allclose(np.asarray(out), np.asarray(ref), rtol=1e-2, atol=1e-2)
    print("KERNEL_OK")
</pallas_src>

<mosaic_0001>
module attributes {stable_mosaic.version = 11 : i64} {
  func.func @_fused_basic_block_kernel(%arg0: memref<32x128xf32, #tpu.memory_space<vmem>>, %arg1: memref<3x128x128xf32, #tpu.memory_space<vmem>>, %arg2: memref<3x128x128xf32, #tpu.memory_space<vmem>>, %arg3: memref<1x128xf32, #tpu.memory_space<vmem>>, %arg4: memref<1x128xf32, #tpu.memory_space<vmem>>, %arg5: memref<1x128xf32, #tpu.memory_space<vmem>>, %arg6: memref<1x128xf32, #tpu.memory_space<vmem>>, %arg7: memref<32x384xf32, #tpu.memory_space<vmem>>) attributes {dimension_semantics = [], scalar_prefetch = 0 : i64, scratch_operands = 0 : i64, tpu.core_type = #tpu.core_type<tc>} {
    %0 = tpu.iota {dimensions = array<i32: 0>} : vector<32x128xi32>
    %c16_i32 = arith.constant 16 : i32
    %c0_i32 = arith.constant 0 : i32
    %1 = arith.cmpi eq, %c16_i32, %c0_i32 : i32
    %c1_i32 = arith.constant 1 : i32
    %2 = arith.select %1, %c1_i32, %c16_i32 : i32
    %3 = vector.broadcast %2 : i32 to vector<32x128xi32>
    %4 = arith.remsi %0, %3 : vector<32x128xi32>
    %c0_i32_0 = arith.constant 0 : i32
    %5 = vector.broadcast %c0_i32_0 : i32 to vector<32x128xi32>
    %6 = arith.cmpi ne, %4, %5 : vector<32x128xi32>
    %c0_i32_1 = arith.constant 0 : i32
    %7 = vector.broadcast %c0_i32_1 : i32 to vector<32x128xi32>
    %8 = arith.cmpi slt, %4, %7 : vector<32x128xi32>
    %c0_i32_2 = arith.constant 0 : i32
    %9 = arith.cmpi slt, %2, %c0_i32_2 : i32
    %10 = vector.broadcast %9 : i1 to vector<32x128xi1>
    %11 = vector.broadcast %10 : vector<32x128xi1> to vector<32x128xi1>
    %12 = arith.xori %8, %11 : vector<32x128xi1>
    %13 = arith.andi %12, %6 : vector<32x128xi1>
    %14 = vector.broadcast %2 : i32 to vector<32x128xi32>
    %15 = arith.addi %4, %14 : vector<32x128xi32>
    %16 = arith.select %13, %15, %4 : vector<32x128xi1>, vector<32x128xi32>
    %c0_i32_3 = arith.constant 0 : i32
    %17 = vector.broadcast %c0_i32_3 : i32 to vector<32x128xi32>
    %18 = arith.cmpi eq, %16, %17 : vector<32x128xi32>
    %c15_i32 = arith.constant 15 : i32
    %19 = vector.broadcast %c15_i32 : i32 to vector<32x128xi32>
    %20 = arith.cmpi eq, %16, %19 : vector<32x128xi32>
    %21 = arith.extui %18 : vector<32x128xi1> to vector<32x128xi32>
    %22 = arith.sitofp %21 : vector<32x128xi32> to vector<32x128xf32>
    %23 = arith.extui %20 : vector<32x128xi1> to vector<32x128xi32>
    %24 = arith.sitofp %23 : vector<32x128xi32> to vector<32x128xf32>
    %c0 = arith.constant 0 : index
    %c0_4 = arith.constant 0 : index
    %25 = vector.load %arg0[%c0, %c0_4] : memref<32x128xf32, #tpu.memory_space<vmem>>, vector<32x128xf32>
    %c1_i32_5 = arith.constant 1 : i32
    %26 = tpu.dynamic_rotate %25 by %c1_i32_5 dim 0 : vector<32x128xf32>, i32 -> vector<32x128xf32>
    %cst = arith.constant 0.000000e+00 : f32
    %27 = vector.broadcast %cst : f32 to vector<32x128xf32>
    %28 = arith.select %18, %27, %26 : vector<32x128xi1>, vector<32x128xf32>
    %c0_6 = arith.constant 0 : index
    %c0_7 = arith.constant 0 : index
    %c0_8 = arith.constant 0 : index
    %29 = vector.load %arg1[%c0_6, %c0_7, %c0_8] : memref<3x128x128xf32, #tpu.memory_space<vmem>>, vector<1x128x128xf32>
    %30 = vector.shape_cast %29 : vector<1x128x128xf32> to vector<128x128xf32>
    %cst_9 = arith.constant dense<0.000000e+00> : vector<32x128xf32>
    %31 = tpu.matmul %28, %30, %cst_9 {dimension_numbers = #tpu.dot_dimension_numbers<[1], [0], [0], [1], [0, 0, 1, 1], [], []>} : vector<32x128xf32>, vector<128x128xf32>, vector<32x128xf32> -> vector<32x128xf32>
    %c1 = arith.constant 1 : index
    %c0_10 = arith.constant 0 : index
    %c0_11 = arith.constant 0 : index
    %32 = vector.load %arg1[%c1, %c0_10, %c0_11] : memref<3x128x128xf32, #tpu.memory_space<vmem>>, vector<1x128x128xf32>
    %33 = vector.shape_cast %32 : vector<1x128x128xf32> to vector<128x128xf32>
    %cst_12 = arith.constant dense<0.000000e+00> : vector<32x128xf32>
    %34 = tpu.matmul %25, %33, %cst_12 {dimension_numbers = #tpu.dot_dimension_numbers<[1], [0], [0], [1], [0, 0, 1, 1], [], []>} : vector<32x128xf32>, vector<128x128xf32>, vector<32x128xf32> -> vector<32x128xf32>
    %35 = arith.addf %31, %34 : vector<32x128xf32>
    %c31_i32 = arith.constant 31 : i32
    %36 = tpu.dynamic_rotate %25 by %c31_i32 dim 0 : vector<32x128xf32>, i32 -> vector<32x128xf32>
    %cst_13 = arith.constant 0.000000e+00 : f32
    %37 = vector.broadcast %cst_13 : f32 to vector<32x128xf32>
    %38 = arith.select %20, %37, %36 : vector<32x128xi1>, vector<32x128xf32>
    %c2 = arith.constant 2 : index
    %c0_14 = arith.constant 0 : index
    %c0_15 = arith.constant 0 : index
    %39 = vector.load %arg1[%c2, %c0_14, %c0_15] : memref<3x128x128xf32, #tpu.memory_space<vmem>>, vector<1x128x128xf32>
    %40 = vector.shape_cast %39 : vector<1x128x128xf32> to vector<128x128xf32>
    %cst_16 = arith.constant dense<0.000000e+00> : vector<32x128xf32>
    %41 = tpu.matmul %38, %40, %cst_16 {dimension_numbers = #tpu.dot_dimension_numbers<[1], [0], [0], [1], [0, 0, 1, 1], [], []>} : vector<32x128xf32>, vector<128x128xf32>, vector<32x128xf32> -> vector<32x128xf32>
    %42 = arith.addf %35, %41 : vector<32x128xf32>
    %cst_17 = arith.constant dense<0.000000e+00> : vector<128xf32>
    %43 = vector.multi_reduction <add>, %42, %cst_17 [0] : vector<32x128xf32> to vector<128xf32>
    %44 = vector.shape_cast %43 : vector<128xf32> to vector<1x128xf32>
    %45 = arith.mulf %42, %42 : vector<32x128xf32>
    %cst_18 = arith.constant dense<0.000000e+00> : vector<128xf32>
    %46 = vector.multi_reduction <add>, %45, %cst_18 [0] : vector<32x128xf32> to vector<128xf32>
    %47 = vector.shape_cast %46 : vector<128xf32> to vector<1x128xf32>
    %c0_19 = arith.constant 0 : index
    %c0_20 = arith.constant 0 : index
    %48 = vector.load %arg3[%c0_19, %c0_20] : memref<1x128xf32, #tpu.memory_space<vmem>>, vector<1x128xf32>
    %c0_21 = arith.constant 0 : index
    %c0_22 = arith.constant 0 : index
    %49 = vector.load %arg4[%c0_21, %c0_22] : memref<1x128xf32, #tpu.memory_space<vmem>>, vector<1x128xf32>
    %cst_23 = arith.constant 0.010416667 : f32
    %50 = vector.broadcast %cst_23 : f32 to vector<1x128xf32>
    %51 = arith.mulf %44, %50 : vector<1x128xf32>
    %cst_24 = arith.constant 0.010416667 : f32
    %52 = vector.broadcast %cst_24 : f32 to vector<1x128xf32>
    %53 = arith.mulf %47, %52 : vector<1x128xf32>
    %54 = arith.mulf %51, %51 : vector<1x128xf32>
    %55 = arith.subf %53, %54 : vector<1x128xf32>
    %cst_25 = arith.constant 0.000000e+00 : f32
    %56 = vector.broadcast %cst_25 : f32 to vector<1x128xf32>
    %57 = arith.maximumf %55, %56 : vector<1x128xf32>
    %cst_26 = arith.constant 9.99999974E-6 : f32
    %58 = vector.broadcast %cst_26 : f32 to vector<1x128xf32>
    %59 = arith.addf %57, %58 : vector<1x128xf32>
    %60 = math.rsqrt %59 : vector<1x128xf32>
    %61 = arith.mulf %48, %60 : vector<1x128xf32>
    %62 = arith.mulf %51, %61 : vector<1x128xf32>
    %63 = arith.subf %49, %62 : vector<1x128xf32>
    %64 = vector.broadcast %61 : vector<1x128xf32> to vector<32x128xf32>
    %65 = arith.mulf %42, %64 : vector<32x128xf32>
    %66 = vector.broadcast %63 : vector<1x128xf32> to vector<32x128xf32>
    %67 = arith.addf %65, %66 : vector<32x128xf32>
    %cst_27 = arith.constant 0.000000e+00 : f32
    %68 = vector.broadcast %cst_27 : f32 to vector<32x128xf32>
    %69 = arith.maximumf %67, %68 : vector<32x128xf32>
    %cst_28 = arith.constant 0.000000e+00 : f32
    %70 = vector.broadcast %cst_28 : f32 to vector<1x128xf32>
    %71 = arith.maximumf %63, %70 : vector<1x128xf32>
    %c1_i32_29 = arith.constant 1 : i32
    %72 = tpu.dynamic_rotate %69 by %c1_i32_29 dim 0 : vector<32x128xf32>, i32 -> vector<32x128xf32>
    %cst_30 = arith.constant 0.000000e+00 : f32
    %73 = vector.broadcast %cst_30 : f32 to vector<32x128xf32>
    %74 = arith.select %18, %73, %72 : vector<32x128xi1>, vector<32x128xf32>
    %c0_31 = arith.constant 0 : index
    %c0_32 = arith.constant 0 : index
    %c0_33 = arith.constant 0 : index
    %75 = vector.load %arg2[%c0_31, %c0_32, %c0_33] : memref<3x128x128xf32, #tpu.memory_space<vmem>>, vector<1x128x128xf32>
    %76 = vector.shape_cast %75 : vector<1x128x128xf32> to vector<128x128xf32>
    %cst_34 = arith.constant dense<0.000000e+00> : vector<32x128xf32>
    %77 = tpu.matmul %74, %76, %cst_34 {dimension_numbers = #tpu.dot_dimension_numbers<[1], [0], [0], [1], [0, 0, 1, 1], [], []>} : vector<32x128xf32>, vector<128x128xf32>, vector<32x128xf32> -> vector<32x128xf32>
    %c1_35 = arith.constant 1 : index
    %c0_36 = arith.constant 0 : index
    %c0_37 = arith.constant 0 : index
    %78 = vector.load %arg2[%c1_35, %c0_36, %c0_37] : memref<3x128x128xf32, #tpu.memory_space<vmem>>, vector<1x128x128xf32>
    %79 = vector.shape_cast %78 : vector<1x128x128xf32> to vector<128x128xf32>
    %cst_38 = arith.constant dense<0.000000e+00> : vector<32x128xf32>
    %80 = tpu.matmul %69, %79, %cst_38 {dimension_numbers = #tpu.dot_dimension_numbers<[1], [0], [0], [1], [0, 0, 1, 1], [], []>} : vector<32x128xf32>, vector<128x128xf32>, vector<32x128xf32> -> vector<32x128xf32>
    %81 = arith.addf %77, %80 : vector<32x128xf32>
    %c31_i32_39 = arith.constant 31 : i32
    %82 = tpu.dynamic_rotate %69 by %c31_i32_39 dim 0 : vector<32x128xf32>, i32 -> vector<32x128xf32>
    %cst_40 = arith.constant 0.000000e+00 : f32
    %83 = vector.broadcast %cst_40 : f32 to vector<32x128xf32>
    %84 = arith.select %20, %83, %82 : vector<32x128xi1>, vector<32x128xf32>
    %c2_41 = arith.constant 2 : index
    %c0_42 = arith.constant 0 : index
    %c0_43 = arith.constant 0 : index
    %85 = vector.load %arg2[%c2_41, %c0_42, %c0_43] : memref<3x128x128xf32, #tpu.memory_space<vmem>>, vector<1x128x128xf32>
    %86 = vector.shape_cast %85 : vector<1x128x128xf32> to vector<128x128xf32>
    %cst_44 = arith.constant dense<0.000000e+00> : vector<32x128xf32>
    %87 = tpu.matmul %84, %86, %cst_44 {dimension_numbers = #tpu.dot_dimension_numbers<[1], [0], [0], [1], [0, 0, 1, 1], [], []>} : vector<32x128xf32>, vector<128x128xf32>, vector<32x128xf32> -> vector<32x128xf32>
    %88 = arith.addf %81, %87 : vector<32x128xf32>
    %c0_45 = arith.constant 0 : index
    %c0_46 = arith.constant 0 : index
    %c0_47 = arith.constant 0 : index
    %89 = vector.load %arg2[%c0_45, %c0_46, %c0_47] : memref<3x128x128xf32, #tpu.memory_space<vmem>>, vector<1x128x128xf32>
    %90 = vector.shape_cast %89 : vector<1x128x128xf32> to vector<128x128xf32>
    %c1_48 = arith.constant 1 : index
    %c0_49 = arith.constant 0 : index
    %c0_50 = arith.constant 0 : index
    %91 = vector.load %arg2[%c1_48, %c0_49, %c0_50] : memref<3x128x128xf32, #tpu.memory_space<vmem>>, vector<1x128x128xf32>
    %92 = vector.shape_cast %91 : vector<1x128x128xf32> to vector<128x128xf32>
    %93 = arith.addf %90, %92 : vector<128x128xf32>
    %c2_51 = arith.constant 2 : index
    %c0_52 = arith.constant 0 : index
    %c0_53 = arith.constant 0 : index
    %94 = vector.load %arg2[%c2_51, %c0_52, %c0_53] : memref<3x128x128xf32, #tpu.memory_space<vmem>>, vector<1x128x128xf32>
    %95 = vector.shape_cast %94 : vector<1x128x128xf32> to vector<128x128xf32>
    %96 = arith.addf %93, %95 : vector<128x128xf32>
    %cst_54 = arith.constant dense<0.000000e+00> : vector<1x128xf32>
    %97 = tpu.matmul %71, %96, %cst_54 {dimension_numbers = #tpu.dot_dimension_numbers<[1], [0], [0], [1], [0, 0, 1, 1], [], []>} : vector<1x128xf32>, vector<128x128xf32>, vector<1x128xf32> -> vector<1x128xf32>
    %c0_55 = arith.constant 0 : index
    %c0_56 = arith.constant 0 : index
    %c0_57 = arith.constant 0 : index
    %98 = vector.load %arg2[%c0_55, %c0_56, %c0_57] : memref<3x128x128xf32, #tpu.memory_space<vmem>>, vector<1x128x128xf32>
    %99 = vector.shape_cast %98 : vector<1x128x128xf32> to vector<128x128xf32>
    %cst_58 = arith.constant dense<0.000000e+00> : vector<1x128xf32>
    %100 = tpu.matmul %71, %99, %cst_58 {dimension_numbers = #tpu.dot_dimension_numbers<[1], [0], [0], [1], [0, 0, 1, 1], [], []>} : vector<1x128xf32>, vector<128x128xf32>, vector<1x128xf32> -> vector<1x128xf32>
    %c2_59 = arith.constant 2 : index
    %c0_60 = arith.constant 0 : index
    %c0_61 = arith.constant 0 : index
    %101 = vector.load %arg2[%c2_59, %c0_60, %c0_61] : memref<3x128x128xf32, #tpu.memory_space<vmem>>, vector<1x128x128xf32>
    %102 = vector.shape_cast %101 : vector<1x128x128xf32> to vector<128x128xf32>
    %cst_62 = arith.constant dense<0.000000e+00> : vector<1x128xf32>
    %103 = tpu.matmul %71, %102, %cst_62 {dimension_numbers = #tpu.dot_dimension_numbers<[1], [0], [0], [1], [0, 0, 1, 1], [], []>} : vector<1x128xf32>, vector<128x128xf32>, vector<1x128xf32> -> vector<1x128xf32>
    %104 = vector.broadcast %100 : vector<1x128xf32> to vector<32x128xf32>
    %105 = arith.mulf %22, %104 : vector<32x128xf32>
    %106 = vector.broadcast %97 : vector<1x128xf32> to vector<32x128xf32>
    %107 = arith.subf %106, %105 : vector<32x128xf32>
    %108 = vector.broadcast %103 : vector<1x128xf32> to vector<32x128xf32>
    %109 = arith.mulf %24, %108 : vector<32x128xf32>
    %110 = arith.subf %107, %109 : vector<32x128xf32>
    %cst_63 = arith.constant dense<0.000000e+00> : vector<128xf32>
    %111 = vector.multi_reduction <add>, %88, %cst_63 [0] : vector<32x128xf32> to vector<128xf32>
    %112 = vector.shape_cast %111 : vector<128xf32> to vector<1x128xf32>
    %cst_64 = arith.constant dense<0.000000e+00> : vector<128xf32>
    %113 = vector.multi_reduction <add>, %110, %cst_64 [0] : vector<32x128xf32> to vector<128xf32>
    %114 = vector.shape_cast %113 : vector<128xf32> to vector<1x128xf32>
    %cst_65 = arith.constant 2.000000e+00 : f32
    %115 = vector.broadcast %cst_65 : f32 to vector<1x128xf32>
    %116 = arith.mulf %115, %114 : vector<1x128xf32>
    %117 = arith.addf %112, %116 : vector<1x128xf32>
    %118 = arith.mulf %88, %88 : vector<32x128xf32>
    %cst_66 = arith.constant dense<0.000000e+00> : vector<128xf32>
    %119 = vector.multi_reduction <add>, %118, %cst_66 [0] : vector<32x128xf32> to vector<128xf32>
    %120 = vector.shape_cast %119 : vector<128xf32> to vector<1x128xf32>
    %121 = arith.mulf %110, %110 : vector<32x128xf32>
    %cst_67 = arith.constant dense<0.000000e+00> : vector<128xf32>
    %122 = vector.multi_reduction <add>, %121, %cst_67 [0] : vector<32x128xf32> to vector<128xf32>
    %123 = vector.shape_cast %122 : vector<128xf32> to vector<1x128xf32>
    %cst_68 = arith.constant 2.000000e+00 : f32
    %124 = vector.broadcast %cst_68 : f32 to vector<1x128xf32>
    %125 = arith.mulf %124, %123 : vector<1x128xf32>
    %126 = arith.addf %120, %125 : vector<1x128xf32>
    %c0_69 = arith.constant 0 : index
    %c0_70 = arith.constant 0 : index
    %127 = vector.load %arg5[%c0_69, %c0_70] : memref<1x128xf32, #tpu.memory_space<vmem>>, vector<1x128xf32>
    %c0_71 = arith.constant 0 : index
    %c0_72 = arith.constant 0 : index
    %128 = vector.load %arg6[%c0_71, %c0_72] : memref<1x128xf32, #tpu.memory_space<vmem>>, vector<1x128xf32>
    %cst_73 = arith.constant 6.250000e-03 : f32
    %129 = vector.broadcast %cst_73 : f32 to vector<1x128xf32>
    %130 = arith.mulf %117, %129 : vector<1x128xf32>
    %cst_74 = arith.constant 6.250000e-03 : f32
    %131 = vector.broadcast %cst_74 : f32 to vector<1x128xf32>
    %132 = arith.mulf %126, %131 : vector<1x128xf32>
    %133 = arith.mulf %130, %130 : vector<1x128xf32>
    %134 = arith.subf %132, %133 : vector<1x128xf32>
    %cst_75 = arith.constant 0.000000e+00 : f32
    %135 = vector.broadcast %cst_75 : f32 to vector<1x128xf32>
    %136 = arith.maximumf %134, %135 : vector<1x128xf32>
    %cst_76 = arith.constant 9.99999974E-6 : f32
    %137 = vector.broadcast %cst_76 : f32 to vector<1x128xf32>
    %138 = arith.addf %136, %137 : vector<1x128xf32>
    %139 = math.rsqrt %138 : vector<1x128xf32>
    %140 = arith.mulf %127, %139 : vector<1x128xf32>
    %141 = arith.mulf %130, %140 : vector<1x128xf32>
    %142 = arith.subf %128, %141 : vector<1x128xf32>
    %143 = vector.broadcast %142 : vector<1x128xf32> to vector<32x128xf32>
    %144 = arith.addf %143, %25 : vector<32x128xf32>
    %cst_77 = arith.constant 0.000000e+00 : f32
    %145 = vector.broadcast %cst_77 : f32 to vector<32x128xf32>
    %146 = arith.maximumf %144, %145 : vector<32x128xf32>
    %147 = vector.broadcast %140 : vector<1x128xf32> to vector<32x128xf32>
    %148 = arith.mulf %110, %147 : vector<32x128xf32>
    %149 = vector.broadcast %142 : vector<1x128xf32> to vector<32x128xf32>
    %150 = arith.addf %148, %149 : vector<32x128xf32>
    %151 = arith.addf %150, %25 : vector<32x128xf32>
    %cst_78 = arith.constant 0.000000e+00 : f32
    %152 = vector.broadcast %cst_78 : f32 to vector<32x128xf32>
    %153 = arith.maximumf %151, %152 : vector<32x128xf32>
    %154 = vector.broadcast %140 : vector<1x128xf32> to vector<32x128xf32>
    %155 = arith.mulf %88, %154 : vector<32x128xf32>
    %156 = vector.broadcast %142 : vector<1x128xf32> to vector<32x128xf32>
    %157 = arith.addf %155, %156 : vector<32x128xf32>
    %158 = arith.addf %157, %25 : vector<32x128xf32>
    %cst_79 = arith.constant 0.000000e+00 : f32
    %159 = vector.broadcast %cst_79 : f32 to vector<32x128xf32>
    %160 = arith.maximumf %158, %159 : vector<32x128xf32>
    %c0_80 = arith.constant 0 : index
    %c0_81 = arith.constant 0 : index
    %161 = vector.load %arg7[%c0_80, %c0_81] : memref<32x384xf32, #tpu.memory_space<vmem>>, vector<32x128xf32>
    tpu.vector_store %arg7[%c0_80, %c0_81], %146 {strides = array<i32>} : memref<32x384xf32, #tpu.memory_space<vmem>>, vector<32x128xf32>,
    %c0_82 = arith.constant 0 : index
    %c128 = arith.constant 128 : index
    %162 = vector.load %arg7[%c0_82, %c128] : memref<32x384xf32, #tpu.memory_space<vmem>>, vector<32x128xf32>
    tpu.vector_store %arg7[%c0_82, %c128], %153 {strides = array<i32>} : memref<32x384xf32, #tpu.memory_space<vmem>>, vector<32x128xf32>,
    %c0_83 = arith.constant 0 : index
    %c256 = arith.constant 256 : index
    %163 = vector.load %arg7[%c0_83, %c256] : memref<32x384xf32, #tpu.memory_space<vmem>>, vector<32x128xf32>
    tpu.vector_store %arg7[%c0_83, %c256], %160 {strides = array<i32>} : memref<32x384xf32, #tpu.memory_space<vmem>>, vector<32x128xf32>,
    return
  }
}

</mosaic_0001>

<llo_original>
// kernel: basic_block_forward.1
$region0: #{basic_block_forward.1}
  #allocation0 [shape = 'u32[]', space=smem, size = 0x4, offset = 0x4, fixed_abs, tag = 'smem constant byte address 0x4 - core index']
  #allocation1 [shape = 'u32[144,128]{1,0:T(1,128)}', space=vmem, size = 0x12000, scoped, tag = 'internal scratch']
  %s0 = inlined_call_operand.vmem [shape: f32[32,128], index: 0, kind: input, shape index: {}]
  %s1 = inlined_call_operand.vmem [shape: f32[3,128,128], index: 1, kind: input, shape index: {}]
  %s2 = inlined_call_operand.vmem [shape: f32[3,128,128], index: 2, kind: input, shape index: {}]
  %s3 = inlined_call_operand.vmem [shape: f32[1,128], index: 3, kind: input, shape index: {}]
  %s4 = inlined_call_operand.vmem [shape: f32[1,128], index: 4, kind: input, shape index: {}]
  %s5 = inlined_call_operand.vmem [shape: f32[1,128], index: 5, kind: input, shape index: {}]
  %s6 = inlined_call_operand.vmem [shape: f32[1,128], index: 6, kind: input, shape index: {}]
  %s7 = inlined_call_operand.vmem [shape: f32[32,384], index: 7, kind: output, shape index: {}]
  %s8 = sld [smem:[#allocation0]]
  $region38: #{basic_block_forward.1} parent=0
    _
  %s10 = ssub.s32 1, %s8
  %s11 = scalar_select 0, %s10, %s8
  // Predicated region
  $region2: #{basic_block_forward.1} parent=0 // pred_check
    _
  $region3: #{basic_block_forward.1} parent=0 // pred_check_branch
    %13 = sbr.rel (0) target = $region5
  $region4: #{basic_block_forward.1} parent=0 // pred_region
    _
  $region5: #{basic_block_forward.1} parent=0 // pred_fallthru
    _
  // Predicated region
  $region6: #{basic_block_forward.1} parent=0 // pred_check
    _
  $region7: #{basic_block_forward.1} parent=0 // pred_check_branch
    %15 = sbr.rel (0) target = $region9
  $region8: #{basic_block_forward.1} parent=0 // pred_region
    _
  $region9: #{basic_block_forward.1} parent=0 // pred_fallthru
    _
  // Predicated region
  $region10: #{basic_block_forward.1} parent=0 // pred_check
    _
  $region11: #{basic_block_forward.1} parent=0 // pred_check_branch
    %17 = sbr.rel (0) target = $region13
  $region12: #{basic_block_forward.1} parent=0 // pred_region
    _
  $region13: #{basic_block_forward.1} parent=0 // pred_fallthru
    _
  // Predicated region
  $region14: #{basic_block_forward.1} parent=0 // pred_check
    _
  $region15: #{basic_block_forward.1} parent=0 // pred_check_branch
    %19 = sbr.rel (0) target = $region17
  $region16: #{basic_block_forward.1} parent=0 // pred_region
    _
  $region17: #{basic_block_forward.1} parent=0 // pred_fallthru
    _
  // Predicated region
  $region18: #{basic_block_forward.1} parent=0 // pred_check
    _
  $region19: #{basic_block_forward.1} parent=0 // pred_check_branch
    %21 = sbr.rel (0) target = $region21
  $region20: #{basic_block_forward.1} parent=0 // pred_region
    _
  $region21: #{basic_block_forward.1} parent=0 // pred_fallthru
    _
  // Predicated region
  $region22: #{basic_block_forward.1} parent=0 // pred_check
    _
  $region23: #{basic_block_forward.1} parent=0 // pred_check_branch
    %23 = sbr.rel (0) target = $region25
  $region24: #{basic_block_forward.1} parent=0 // pred_region
    _
  $region25: #{basic_block_forward.1} parent=0 // pred_fallthru
    _
  // Predicated region
  $region26: #{basic_block_forward.1} parent=0 // pred_check
    _
  $region27: #{basic_block_forward.1} parent=0 // pred_check_branch
    %25 = sbr.rel (0) target = $region29
  $region28: #{basic_block_forward.1} parent=0 // pred_region
    _
  $region29: #{basic_block_forward.1} parent=0 // pred_fallthru
    _
  %v26 = vlaneseq
  %v27 = vshrl.u32 %v26, 7
  %v28 = vadd.s32 %v27, 8
  %v29 = vadd.s32 %v27, 16
  %v30 = vadd.s32 %v27, 24
  %vm31 = vcmp.lt.s32.totalorder %v27, 0
  %v32 = vsub.s32 0, %v27
  %v33 = vsel %vm31, %v32, %v27
  %v34 = vshrl.u32 %v33, 4
  %v35 = vand.u32 %v33, 15
  %v36 = vsub.s32 0, %v35
  %v37 = vsel %vm31, %v36, %v35
  %vm38 = vcmp.lt.s32.totalorder %v28, 0
  %v39 = vsub.s32 0, %v28
  %v40 = vsel %vm38, %v39, %v28
  %v41 = vshrl.u32 %v40, 4
  %v42 = vand.u32 %v40, 15
  %v43 = vsub.s32 0, %v42
  %v44 = vsel %vm38, %v43, %v42
  %vm45 = vcmp.lt.s32.totalorder %v29, 0
  %v46 = vsub.s32 0, %v29
  %v47 = vsel %vm45, %v46, %v29
  %v48 = vshrl.u32 %v47, 4
  %v49 = vand.u32 %v47, 15
  %v50 = vsub.s32 0, %v49
  %v51 = vsel %vm45, %v50, %v49
  %vm52 = vcmp.lt.s32.totalorder %v30, 0
  %v53 = vsub.s32 0, %v30
  %v54 = vsel %vm52, %v53, %v30
  %v55 = vshrl.u32 %v54, 4
  %v56 = vand.u32 %v54, 15
  %v57 = vsub.s32 0, %v56
  %v58 = vsel %vm52, %v57, %v56
  %vm59 = vcmp.ne.s32.totalorder %v37, 0
  %vm60 = vcmp.ne.s32.totalorder %v44, 0
  %vm61 = vcmp.ne.s32.totalorder %v51, 0
  %vm62 = vcmp.ne.s32.totalorder %v58, 0
  %vm63 = vcmp.lt.s32.totalorder %v37, 0
  %vm64 = vcmp.lt.s32.totalorder %v44, 0
  %vm65 = vcmp.lt.s32.totalorder %v51, 0
  %vm66 = vcmp.lt.s32.totalorder %v58, 0
  %vm67 = vmand %vm63, %vm59
  %vm68 = vmand %vm64, %vm60
  %vm69 = vmand %vm65, %vm61
  %vm70 = vmand %vm66, %vm62
  %v71 = vadd.s32 %v37, 16
  %v72 = vadd.s32 %v44, 16
  %v73 = vadd.s32 %v51, 16
  %v74 = vadd.s32 %v58, 16
  %v75 = vsel %vm67, %v71, %v37
  %v76 = vsel %vm68, %v72, %v44
  %v77 = vsel %vm69, %v73, %v51
  %v78 = vsel %vm70, %v74, %v58
  %vm79 = vcmp.eq.s32.totalorder %v75, 0
  %vm80 = vcmp.eq.s32.totalorder %v76, 0
  %vm81 = vcmp.eq.s32.totalorder %v77, 0
  %vm82 = vcmp.eq.s32.totalorder %v78, 0
  %vm83 = vcmp.eq.s32.totalorder %v75, 15
  %vm84 = vcmp.eq.s32.totalorder %v76, 15
  %vm85 = vcmp.eq.s32.totalorder %v77, 15
  %vm86 = vcmp.eq.s32.totalorder %v78, 15
  %v87 = vsel %vm79, 1, 0
  %v88 = vsel %vm80, 1, 0
  %v89 = vsel %vm81, 1, 0
  %v90 = vsel %vm82, 1, 0
  %v91 = vcvt.s32.f32 %v87
  %v92 = vcvt.s32.f32 %v88
  %v93 = vcvt.s32.f32 %v89
  %v94 = vcvt.s32.f32 %v90
  %v95 = vsel %vm83, 1, 0
  %v96 = vsel %vm84, 1, 0
  %v97 = vsel %vm85, 1, 0
  %v98 = vsel %vm86, 1, 0
  %v99 = vcvt.s32.f32 %v95
  %v100 = vcvt.s32.f32 %v96
  %v101 = vcvt.s32.f32 %v97
  %v102 = vcvt.s32.f32 %v98
  %v103 = vld [vmem:[%s0] sm:$0xff]
  %v104 = vld [vmem:[%s0 + $0x8] sm:$0xff]
  %v105 = vld [vmem:[%s0 + $0x10] sm:$0xff]
  %v106 = vld [vmem:[%s0 + $0x18] sm:$0xff]
  %v107 = vrot.slane %v103, 7
  %v108 = vrot.slane %v104, 7
  %v109 = vrot.slane %v105, 7
  %v110 = vrot.slane %v106, 7
  %vm111 = vcmp.lt.s32.totalorder %v27, 1
  %v112 = vsel %vm111, %v109, %v110
  %v113 = vsel %vm111, %v108, %v109
  %v114 = vsel %vm111, %v107, %v108
  %v115 = vsel %vm111, %v110, %v107
  %v116 = vsel %vm79, 0.0, %v115
  %v117 = vsel %vm80, 0.0, %v114
  %v118 = vsel %vm81, 0.0, %v113
  %v119 = vsel %vm82, 0.0, %v112
  %v120 = vld [vmem:[%s1] sm:$0xff]
  %v121 = vld [vmem:[%s1 + $0x8] sm:$0xff]
  %v122 = vld [vmem:[%s1 + $0x10] sm:$0xff]
  %v123 = vld [vmem:[%s1 + $0x18] sm:$0xff]
  %v124 = vld [vmem:[%s1 + $0x20] sm:$0xff]
  %v125 = vld [vmem:[%s1 + $0x28] sm:$0xff]
  %v126 = vld [vmem:[%s1 + $0x30] sm:$0xff]
  %v127 = vld [vmem:[%s1 + $0x38] sm:$0xff]
  %v128 = vld [vmem:[%s1 + $0x40] sm:$0xff]
  %v129 = vld [vmem:[%s1 + $0x48] sm:$0xff]
  %v130 = vld [vmem:[%s1 + $0x50] sm:$0xff]
  %v131 = vld [vmem:[%s1 + $0x58] sm:$0xff]
  %v132 = vld [vmem:[%s1 + $0x60] sm:$0xff]
  %v133 = vld [vmem:[%s1 + $0x68] sm:$0xff]
  %v134 = vld [vmem:[%s1 + $0x70] sm:$0xff]
  %v135 = vld [vmem:[%s1 + $0x78] sm:$0xff]
  %s136 = scalar_lea.vmem %s1, 128
  %v137 = vld [vmem:[%s136] sm:$0xff]
  %v138 = vld [vmem:[%s136 + $0x8] sm:$0xff]
  %v139 = vld [vmem:[%s136 + $0x10] sm:$0xff]
  %v140 = vld [vmem:[%s136 + $0x18] sm:$0xff]
  %v141 = vld [vmem:[%s136 + $0x20] sm:$0xff]
  %v142 = vld [vmem:[%s136 + $0x28] sm:$0xff]
  %v143 = vld [vmem:[%s136 + $0x30] sm:$0xff]
  %v144 = vld [vmem:[%s136 + $0x38] sm:$0xff]
  %v145 = vld [vmem:[%s136 + $0x40] sm:$0xff]
  %v146 = vld [vmem:[%s136 + $0x48] sm:$0xff]
  %v147 = vld [vmem:[%s136 + $0x50] sm:$0xff]
  %v148 = vld [vmem:[%s136 + $0x58] sm:$0xff]
  %v149 = vld [vmem:[%s136 + $0x60] sm:$0xff]
  %v150 = vld [vmem:[%s136 + $0x68] sm:$0xff]
  %v151 = vld [vmem:[%s136 + $0x70] sm:$0xff]
  %v152 = vld [vmem:[%s136 + $0x78] sm:$0xff]
  %153 = vmatprep.subr.mxu0 0.0
  %154 = vmatpush1.msra.mxu0 %v152
  %155 = vmatprep.subr.mxu0 0.0
  %156 = vmatpush1.msra.mxu0 %v151
  %157 = vmatprep.subr.mxu0 0.0
  %158 = vmatpush1.msra.mxu0 %v150
  %159 = vmatprep.subr.mxu0 0.0
  %160 = vmatpush1.msra.mxu0 %v149
  %161 = vmatprep.subr.mxu0 0.0
  %162 = vmatpush1.msra.mxu0 %v148
  %163 = vmatprep.subr.mxu0 0.0
  %164 = vmatpush1.msra.mxu0 %v147
  %165 = vmatprep.subr.mxu0 0.0
  %166 = vmatpush1.msra.mxu0 %v146
  %167 = vmatprep.subr.mxu0 0.0
  %168 = vmatpush1.msra.mxu0 %v145
  %169 = vmatprep.subr.mxu0 0.0
  %170 = vmatpush1.msra.mxu0 %v144
  %171 = vmatprep.subr.mxu0 0.0
  %172 = vmatpush1.msra.mxu0 %v143
  %173 = vmatprep.subr.mxu0 0.0
  %174 = vmatpush1.msra.mxu0 %v142
  %175 = vmatprep.subr.mxu0 0.0
  %176 = vmatpush1.msra.mxu0 %v141
  %177 = vmatprep.subr.mxu0 0.0
  %178 = vmatpush1.msra.mxu0 %v140
  %179 = vmatprep.subr.mxu0 0.0
  %180 = vmatpush1.msra.mxu0 %v139
  %181 = vmatprep.subr.mxu0 0.0
  %182 = vmatpush1.msra.mxu0 %v138
  %183 = vmatprep.subr.mxu0 0.0
  %184 = vmatpush1.msra.mxu0 %v137
  %185 = vmatprep.subr.mxu0 0.0
  %186 = vmatpush2.msra.mxu0 0.0
  %187 = vmatprep.subr.mxu0 0.0
  %188 = vmatpush2.msra.mxu0 0.0
  %189 = vmatprep.subr.mxu0 0.0
  %190 = vmatpush2.msra.mxu0 0.0
  %191 = vmatprep.subr.mxu0 0.0
  %192 = vmatpush2.msra.mxu0 0.0
  %193 = vmatprep.subr.mxu0 0.0
  %194 = vmatpush2.msra.mxu0 0.0
  %195 = vmatprep.subr.mxu0 0.0
  %196 = vmatpush2.msra.mxu0 0.0
  %197 = vmatprep.subr.mxu0 0.0
  %198 = vmatpush2.msra.mxu0 0.0
  %199 = vmatprep.subr.mxu0 0.0
  %200 = vmatpush2.msra.mxu0 0.0
  %201 = vmatprep.subr.mxu0 0.0
  %202 = vmatpush2.msra.mxu0 0.0
  %203 = vmatprep.subr.mxu0 0.0
  %204 = vmatpush2.msra.mxu0 0.0
  %205 = vmatprep.subr.mxu0 0.0
  %206 = vmatpush2.msra.mxu0 0.0
  %207 = vmatprep.subr.mxu0 0.0
  %208 = vmatpush2.msra.mxu0 0.0
  %209 = vmatprep.subr.mxu0 0.0
  %210 = vmatpush2.msra.mxu0 0.0
  %211 = vmatprep.subr.mxu0 0.0
  %212 = vmatpush2.msra.mxu0 0.0
  %213 = vmatprep.subr.mxu0 0.0
  %214 = vmatpush2.msra.mxu0 0.0
  %215 = vmatprep.subr.mxu0 0.0
  %216 = vmatpush2.msra.mxu0 0.0
  %217 = vmatprep.mubr.f32.mxu0 0.0
  %218 = vmatmul.mubr.f32.gmra.mxu0 %v103
  %v219 = vpop.f32.mrf.mxu0
  %v220 = vadd.f32 0.0, %v219
  %v221 = vpop.f32.mrf.mxu0
  %222 = vmatprep.mubr.f32.mxu0 0.0
  %223 = vmatmul.mubr.f32.gmra.mxu0 %v104
  %v224 = vpop.f32.mrf.mxu0
  %v225 = vadd.f32 0.0, %v224
  %v226 = vpop.f32.mrf.mxu0
  %227 = vmatprep.mubr.f32.mxu0 0.0
  %228 = vmatmul.mubr.f32.gmra.mxu0 %v105
  %v229 = vpop.f32.mrf.mxu0
  %v230 = vadd.f32 0.0, %v229
  %v231 = vpop.f32.mrf.mxu0
  %232 = vmatprep.mubr.f32.mxu0 0.0
  %233 = vmatmul.mubr.f32.gmra.mxu0 %v106
  %v234 = vpop.f32.mrf.mxu0
  %v235 = vadd.f32 0.0, %v234
  %v236 = vpop.f32.mrf.mxu0
  %237 = vdwg.mxu0
  %238 = vmatprep.subr.mxu0 0.0
  %239 = vmatpush1.msra.mxu0 %v135
  %240 = vmatprep.subr.mxu0 0.0
  %241 = vmatpush1.msra.mxu0 %v134
  %242 = vmatprep.subr.mxu0 0.0
  %243 = vmatpush1.msra.mxu0 %v133
  %244 = vmatprep.subr.mxu0 0.0
  %245 = vmatpush1.msra.mxu0 %v132
  %246 = vmatprep.subr.mxu0 0.0
  %247 = vmatpush1.msra.mxu0 %v131
  %248 = vmatprep.subr.mxu0 0.0
  %249 = vmatpush1.msra.mxu0 %v130
  %250 = vmatprep.subr.mxu0 0.0
  %251 = vmatpush1.msra.mxu0 %v129
  %252 = vmatprep.subr.mxu0 0.0
  %253 = vmatpush1.msra.mxu0 %v128
  %254 = vmatprep.subr.mxu0 0.0
  %255 = vmatpush1.msra.mxu0 %v127
  %256 = vmatprep.subr.mxu0 0.0
  %257 = vmatpush1.msra.mxu0 %v126
  %258 = vmatprep.subr.mxu0 0.0
  %259 = vmatpush1.msra.mxu0 %v125
  %260 = vmatprep.subr.mxu0 0.0
  %261 = vmatpush1.msra.mxu0 %v124
  %262 = vmatprep.subr.mxu0 0.0
  %263 = vmatpush1.msra.mxu0 %v123
  %264 = vmatprep.subr.mxu0 0.0
  %265 = vmatpush1.msra.mxu0 %v122
  %266 = vmatprep.subr.mxu0 0.0
  %267 = vmatpush1.msra.mxu0 %v121
  %268 = vmatprep.subr.mxu0 0.0
  %269 = vmatpush1.msra.mxu0 %v120
  %270 = vmatprep.subr.mxu0 0.0
  %271 = vmatpush2.msra.mxu0 0.0
  %272 = vmatprep.subr.mxu0 0.0
  %273 = vmatpush2.msra.mxu0 0.0
  %274 = vmatprep.subr.mxu0 0.0
  %275 = vmatpush2.msra.mxu0 0.0
  %276 = vmatprep.subr.mxu0 0.0
  %277 = vmatpush2.msra.mxu0 0.0
  %278 = vmatprep.subr.mxu0 0.0
  %279 = vmatpush2.msra.mxu0 0.0
  %280 = vmatprep.subr.mxu0 0.0
  %281 = vmatpush2.msra.mxu0 0.0
  %282 = vmatprep.subr.mxu0 0.0
  %283 = vmatpush2.msra.mxu0 0.0
  %284 = vmatprep.subr.mxu0 0.0
  %285 = vmatpush2.msra.mxu0 0.0
  %286 = vmatprep.subr.mxu0 0.0
  %287 = vmatpush2.msra.mxu0 0.0
  %288 = vmatprep.subr.mxu0 0.0
  %289 = vmatpush2.msra.mxu0 0.0
  %290 = vmatprep.subr.mxu0 0.0
  %291 = vmatpush2.msra.mxu0 0.0
  %292 = vmatprep.subr.mxu0 0.0
  %293 = vmatpush2.msra.mxu0 0.0
  %294 = vmatprep.subr.mxu0 0.0
  %295 = vmatpush2.msra.mxu0 0.0
  %296 = vmatprep.subr.mxu0 0.0
  %297 = vmatpush2.msra.mxu0 0.0
  %298 = vmatprep.subr.mxu0 0.0
  %299 = vmatpush2.msra.mxu0 0.0
  %300 = vmatprep.subr.mxu0 0.0
  %301 = vmatpush2.msra.mxu0 0.0
  %302 = vmatprep.mubr.f32.mxu0 0.0
  %303 = vmatmul.mubr.f32.gmra.mxu0 %v116
  %v304 = vpop.f32.mrf.mxu0
  %v305 = vadd.f32 %v220, %v304
  %v306 = vpop.f32.mrf.mxu0
  %307 = vmatprep.mubr.f32.mxu0 0.0
  %308 = vmatmul.mubr.f32.gmra.mxu0 %v117
  %v309 = vpop.f32.mrf.mxu0
  %v310 = vadd.f32 %v225, %v309
  %v311 = vpop.f32.mrf.mxu0
  %312 = vmatprep.mubr.f32.mxu0 0.0
  %313 = vmatmul.mubr.f32.gmra.mxu0 %v118
  %v314 = vpop.f32.mrf.mxu0
  %v315 = vadd.f32 %v230, %v314
  %v316 = vpop.f32.mrf.mxu0
  %317 = vmatprep.mubr.f32.mxu0 0.0
  %318 = vmatmul.mubr.f32.gmra.mxu0 %v119
  %v319 = vpop.f32.mrf.mxu0
  %v320 = vadd.f32 %v235, %v319
  %v321 = vpop.f32.mrf.mxu0
  %322 = vdwg.mxu0
  %v323 = vrot.slane %v103, 1
  %v324 = vrot.slane %v104, 1
  %v325 = vrot.slane %v105, 1
  %v326 = vrot.slane %v106, 1
  %vm327 = vcmp.lt.s32.totalorder %v27, 7
  %v328 = vsel %vm327, %v325, %v326
  %v329 = vsel %vm327, %v324, %v325
  %v330 = vsel %vm327, %v323, %v324
  %v331 = vsel %vm327, %v326, %v323
  %v332 = vsel %vm83, 0.0, %v330
  %v333 = vsel %vm84, 0.0, %v329
  %v334 = vsel %vm85, 0.0, %v328
  %v335 = vsel %vm86, 0.0, %v331
  %s336 = scalar_lea.vmem %s1, 256
  %v337 = vld [vmem:[%s336] sm:$0xff]
  %v338 = vld [vmem:[%s336 + $0x8] sm:$0xff]
  %v339 = vld [vmem:[%s336 + $0x10] sm:$0xff]
  %v340 = vld [vmem:[%s336 + $0x18] sm:$0xff]
  %v341 = vld [vmem:[%s336 + $0x20] sm:$0xff]
  %v342 = vld [vmem:[%s336 + $0x28] sm:$0xff]
  %v343 = vld [vmem:[%s336 + $0x30] sm:$0xff]
  %v344 = vld [vmem:[%s336 + $0x38] sm:$0xff]
  %v345 = vld [vmem:[%s336 + $0x40] sm:$0xff]
  %v346 = vld [vmem:[%s336 + $0x48] sm:$0xff]
  %v347 = vld [vmem:[%s336 + $0x50] sm:$0xff]
  %v348 = vld [vmem:[%s336 + $0x58] sm:$0xff]
  %v349 = vld [vmem:[%s336 + $0x60] sm:$0xff]
  %v350 = vld [vmem:[%s336 + $0x68] sm:$0xff]
  %v351 = vld [vmem:[%s336 + $0x70] sm:$0xff]
  %v352 = vld [vmem:[%s336 + $0x78] sm:$0xff]
  %353 = vmatprep.subr.mxu0 0.0
  %354 = vmatpush1.msra.mxu0 %v352
  %355 = vmatprep.subr.mxu0 0.0
  %356 = vmatpush1.msra.mxu0 %v351
  %357 = vmatprep.subr.mxu0 0.0
  %358 = vmatpush1.msra.mxu0 %v350
  %359 = vmatprep.subr.mxu0 0.0
  %360 = vmatpush1.msra.mxu0 %v349
  %361 = vmatprep.subr.mxu0 0.0
  %362 = vmatpush1.msra.mxu0 %v348
  %363 = vmatprep.subr.mxu0 0.0
  %364 = vmatpush1.msra.mxu0 %v347
  %365 = vmatprep.subr.mxu0 0.0
  %366 = vmatpush1.msra.mxu0 %v346
  %367 = vmatprep.subr.mxu0 0.0
  %368 = vmatpush1.msra.mxu0 %v345
  %369 = vmatprep.subr.mxu0 0.0
  %370 = vmatpush1.msra.mxu0 %v344
  %371 = vmatprep.subr.mxu0 0.0
  %372 = vmatpush1.msra.mxu0 %v343
  %373 = vmatprep.subr.mxu0 0.0
  %374 = vmatpush1.msra.mxu0 %v342
  %375 = vmatprep.subr.mxu0 0.0
  %376 = vmatpush1.msra.mxu0 %v341
  %377 = vmatprep.subr.mxu0 0.0
  %378 = vmatpush1.msra.mxu0 %v340
  %379 = vmatprep.subr.mxu0 0.0
  %380 = vmatpush1.msra.mxu0 %v339
  %381 = vmatprep.subr.mxu0 0.0
  %382 = vmatpush1.msra.mxu0 %v338
  %383 = vmatprep.subr.mxu0 0.0
  %384 = vmatpush1.msra.mxu0 %v337
  %385 = vmatprep.subr.mxu0 0.0
  %386 = vmatpush2.msra.mxu0 0.0
  %387 = vmatprep.subr.mxu0 0.0
  %388 = vmatpush2.msra.mxu0 0.0
  %389 = vmatprep.subr.mxu0 0.0
  %390 = vmatpush2.msra.mxu0 0.0
  %391 = vmatprep.subr.mxu0 0.0
  %392 = vmatpush2.msra.mxu0 0.0
  %393 = vmatprep.subr.mxu0 0.0
  %394 = vmatpush2.msra.mxu0 0.0
  %395 = vmatprep.subr.mxu0 0.0
  %396 = vmatpush2.msra.mxu0 0.0
  %397 = vmatprep.subr.mxu0 0.0
  %398 = vmatpush2.msra.mxu0 0.0
  %399 = vmatprep.subr.mxu0 0.0
  %400 = vmatpush2.msra.mxu0 0.0
  %401 = vmatprep.subr.mxu0 0.0
  %402 = vmatpush2.msra.mxu0 0.0
  %403 = vmatprep.subr.mxu0 0.0
  %404 = vmatpush2.msra.mxu0 0.0
  %405 = vmatprep.subr.mxu0 0.0
  %406 = vmatpush2.msra.mxu0 0.0
  %407 = vmatprep.subr.mxu0 0.0
  %408 = vmatpush2.msra.mxu0 0.0
  %409 = vmatprep.subr.mxu0 0.0
  %410 = vmatpush2.msra.mxu0 0.0
  %411 = vmatprep.subr.mxu0 0.0
  %412 = vmatpush2.msra.mxu0 0.0
  %413 = vmatprep.subr.mxu0 0.0
  %414 = vmatpush2.msra.mxu0 0.0
  %415 = vmatprep.subr.mxu0 0.0
  %416 = vmatpush2.msra.mxu0 0.0
  %417 = vmatprep.mubr.f32.mxu0 0.0
  %418 = vmatmul.mubr.f32.gmra.mxu0 %v332
  %v419 = vpop.f32.mrf.mxu0
  %v420 = vadd.f32 0.0, %v419
  %v421 = vpop.f32.mrf.mxu0
  %422 = vmatprep.mubr.f32.mxu0 0.0
  %423 = vmatmul.mubr.f32.gmra.mxu0 %v333
  %v424 = vpop.f32.mrf.mxu0
  %v425 = vadd.f32 0.0, %v424
  %v426 = vpop.f32.mrf.mxu0
  %427 = vmatprep.mubr.f32.mxu0 0.0
  %428 = vmatmul.mubr.f32.gmra.mxu0 %v334
  %v429 = vpop.f32.mrf.mxu0
  %v430 = vadd.f32 0.0, %v429
  %v431 = vpop.f32.mrf.mxu0
  %432 = vmatprep.mubr.f32.mxu0 0.0
  %433 = vmatmul.mubr.f32.gmra.mxu0 %v335
  %v434 = vpop.f32.mrf.mxu0
  %v435 = vadd.f32 0.0, %v434
  %v436 = vpop.f32.mrf.mxu0
  %437 = vdwg.mxu0
  %v438 = vadd.f32 %v305, %v420
  %v439 = vadd.f32 %v310, %v425
  %v440 = vadd.f32 %v315, %v430
  %v441 = vadd.f32 %v320, %v435
  %v442 = vadd.f32 %v438, %v439
  %v443 = vadd.f32 %v442, %v440
  %v444 = vadd.f32 %v443, %v441
  %v445 = vrot.slane %v444, 4
  %v446 = vadd.f32 %v444, %v445
  %v447 = vrot.slane %v446, 2
  %v448 = vadd.f32 %v446, %v447
  %v449 = vrot.slane %v448, 1
  %v450 = vadd.f32 %v448, %v449
  %v451 = vmul.f32 %v438, %v438
  %v452 = vmul.f32 %v439, %v439
  %v453 = vmul.f32 %v440, %v440
  %v454 = vmul.f32 %v441, %v441
  %v455 = vadd.f32 %v451, %v452
  %v456 = vadd.f32 %v455, %v453
  %v457 = vadd.f32 %v456, %v454
  %v458 = vrot.slane %v457, 4
  %v459 = vadd.f32 %v457, %v458
  %v460 = vrot.slane %v459, 2
  %v461 = vadd.f32 %v459, %v460
  %v462 = vrot.slane %v461, 1
  %v463 = vadd.f32 %v461, %v462
  %v464 = vld [vmem:[%s3] sm:$0x1]
  %v465 = vld [vmem:[%s4] sm:$0x1]
  %v466 = vmul.f32 %v450, 0.010416667
  %v467 = vmul.f32 %v463, 0.010416667
  %v468 = vmul.f32 %v466, %v466
  %v469 = vsub.f32 %v467, %v468
  %v470 = vmax.f32 %v469, 0.0
  %v471 = vadd.f32 %v470, 1e-05
  %v472 = vrsqrt.pop %v471
  %v473 = vmul.f32 %v464, %v472
  %v474 = vmul.f32 %v466, %v473
  %v475 = vsub.f32 %v465, %v474
  %v477 = vlaneseq
  %v478 = vshrl.u32 %v477, 7
  %v479 = vsub.s32 0, %v478
  %v480 = vrot.slane %v473, %v479
  %v482 = vmul.f32 %v438, %v480
  %v483 = vmul.f32 %v439, %v480
  %v484 = vmul.f32 %v440, %v480
  %v485 = vmul.f32 %v441, %v480
  %v487 = vlaneseq
  %v488 = vshrl.u32 %v487, 7
  %v489 = vsub.s32 0, %v488
  %v490 = vrot.slane %v475, %v489
  %v492 = vadd.f32 %v482, %v490
  %v493 = vadd.f32 %v483, %v490
  %v494 = vadd.f32 %v484, %v490
  %v495 = vadd.f32 %v485, %v490
  %v496 = vmax.f32 %v492, 0.0
  %v497 = vmax.f32 %v493, 0.0
  %v498 = vmax.f32 %v494, 0.0
  %v499 = vmax.f32 %v495, 0.0
  %v500 = vmax.f32 %v475, 0.0
  %v501 = vrot.slane %v496, 7
  %v502 = vrot.slane %v497, 7
  %v503 = vrot.slane %v498, 7
  %v504 = vrot.slane %v499, 7
  %v505 = vsel %vm111, %v503, %v504
  %v506 = vsel %vm111, %v502, %v503
  %v507 = vsel %vm111, %v501, %v502
  %v508 = vsel %vm111, %v504, %v501
  %v509 = vsel %vm79, 0.0, %v508
  %v510 = vsel %vm80, 0.0, %v507
  %v511 = vsel %vm81, 0.0, %v506
  %v512 = vsel %vm82, 0.0, %v505
  %v513 = vld [vmem:[%s2] sm:$0xff]
  %v514 = vld [vmem:[%s2 + $0x8] sm:$0xff]
  %v515 = vld [vmem:[%s2 + $0x10] sm:$0xff]
  %v516 = vld [vmem:[%s2 + $0x18] sm:$0xff]
  %v517 = vld [vmem:[%s2 + $0x20] sm:$0xff]
  %v518 = vld [vmem:[%s2 + $0x28] sm:$0xff]
  %v519 = vld [vmem:[%s2 + $0x30] sm:$0xff]
  %v520 = vld [vmem:[%s2 + $0x38] sm:$0xff]
  %v521 = vld [vmem:[%s2 + $0x40] sm:$0xff]
  %v522 = vld [vmem:[%s2 + $0x48] sm:$0xff]
  %v523 = vld [vmem:[%s2 + $0x50] sm:$0xff]
  %v524 = vld [vmem:[%s2 + $0x58] sm:$0xff]
  %v525 = vld [vmem:[%s2 + $0x60] sm:$0xff]
  %v526 = vld [vmem:[%s2 + $0x68] sm:$0xff]
  %v527 = vld [vmem:[%s2 + $0x70] sm:$0xff]
  %v528 = vld [vmem:[%s2 + $0x78] sm:$0xff]
  %s529 = scalar_lea.vmem %s2, 128
  %v530 = vld [vmem:[%s529] sm:$0xff]
  %v531 = vld [vmem:[%s529 + $0x8] sm:$0xff]
  %v532 = vld [vmem:[%s529 + $0x10] sm:$0xff]
  %v533 = vld [vmem:[%s529 + $0x18] sm:$0xff]
  %v534 = vld [vmem:[%s529 + $0x20] sm:$0xff]
  %v535 = vld [vmem:[%s529 + $0x28] sm:$0xff]
  %v536 = vld [vmem:[%s529 + $0x30] sm:$0xff]
  %v537 = vld [vmem:[%s529 + $0x38] sm:$0xff]
  %v538 = vld [vmem:[%s529 + $0x40] sm:$0xff]
  %v539 = vld [vmem:[%s529 + $0x48] sm:$0xff]
  %v540 = vld [vmem:[%s529 + $0x50] sm:$0xff]
  %v541 = vld [vmem:[%s529 + $0x58] sm:$0xff]
  %v542 = vld [vmem:[%s529 + $0x60] sm:$0xff]
  %v543 = vld [vmem:[%s529 + $0x68] sm:$0xff]
  %v544 = vld [vmem:[%s529 + $0x70] sm:$0xff]
  %v545 = vld [vmem:[%s529 + $0x78] sm:$0xff]
  %546 = vmatprep.subr.mxu0 0.0
  %547 = vmatpush1.msra.mxu0 %v545
  %548 = vmatprep.subr.mxu0 0.0
  %549 = vmatpush1.msra.mxu0 %v544
  %550 = vmatprep.subr.mxu0 0.0
  %551 = vmatpush1.msra.mxu0 %v543
  %552 = vmatprep.subr.mxu0 0.0
  %553 = vmatpush1.msra.mxu0 %v542
  %554 = vmatprep.subr.mxu0 0.0
  %555 = vmatpush1.msra.mxu0 %v541
  %556 = vmatprep.subr.mxu0 0.0
  %557 = vmatpush1.msra.mxu0 %v540
  %558 = vmatprep.subr.mxu0 0.0
  %559 = vmatpush1.msra.mxu0 %v539
  %560 = vmatprep.subr.mxu0 0.0
  %561 = vmatpush1.msra.mxu0 %v538
  %562 = vmatprep.subr.mxu0 0.0
  %563 = vmatpush1.msra.mxu0 %v537
  %564 = vmatprep.subr.mxu0 0.0
  %565 = vmatpush1.msra.mxu0 %v536
  %566 = vmatprep.subr.mxu0 0.0
  %567 = vmatpush1.msra.mxu0 %v535
  %568 = vmatprep.subr.mxu0 0.0
  %569 = vmatpush1.msra.mxu0 %v534
  %570 = vmatprep.subr.mxu0 0.0
  %571 = vmatpush1.msra.mxu0 %v533
  %572 = vmatprep.subr.mxu0 0.0
  %573 = vmatpush1.msra.mxu0 %v532
  %574 = vmatprep.subr.mxu0 0.0
  %575 = vmatpush1.msra.mxu0 %v531
  %576 = vmatprep.subr.mxu0 0.0
  %577 = vmatpush1.msra.mxu0 %v530
  %578 = vmatprep.subr.mxu0 0.0
  %579 = vmatpush2.msra.mxu0 0.0
  %580 = vmatprep.subr.mxu0 0.0
  %581 = vmatpush2.msra.mxu0 0.0
  %582 = vmatprep.subr.mxu0 0.0
  %583 = vmatpush2.msra.mxu0 0.0
  %584 = vmatprep.subr.mxu0 0.0
  %585 = vmatpush2.msra.mxu0 0.0
  %586 = vmatprep.subr.mxu0 0.0
  %587 = vmatpush2.msra.mxu0 0.0
  %588 = vmatprep.subr.mxu0 0.0
  %589 = vmatpush2.msra.mxu0 0.0
  %590 = vmatprep.subr.mxu0 0.0
  %591 = vmatpush2.msra.mxu0 0.0
  %592 = vmatprep.subr.mxu0 0.0
  %593 = vmatpush2.msra.mxu0 0.0
  %594 = vmatprep.subr.mxu0 0.0
  %595 = vmatpush2.msra.mxu0 0.0
  %596 = vmatprep.subr.mxu0 0.0
  %597 = vmatpush2.msra.mxu0 0.0
  %598 = vmatprep.subr.mxu0 0.0
  %599 = vmatpush2.msra.mxu0 0.0
  %600 = vmatprep.subr.mxu0 0.0
  %601 = vmatpush2.msra.mxu0 0.0
  %602 = vmatprep.subr.mxu0 0.0
  %603 = vmatpush2.msra.mxu0 0.0
  %604 = vmatprep.subr.mxu0 0.0
  %605 = vmatpush2.msra.mxu0 0.0
  %606 = vmatprep.subr.mxu0 0.0
  %607 = vmatpush2.msra.mxu0 0.0
  %608 = vmatprep.subr.mxu0 0.0
  %609 = vmatpush2.msra.mxu0 0.0
  %610 = vmatprep.mubr.f32.mxu0 0.0
  %611 = vmatmul.mubr.f32.gmra.mxu0 %v496
  %v612 = vpop.f32.mrf.mxu0
  %v613 = vadd.f32 0.0, %v612
  %v614 = vpop.f32.mrf.mxu0
  %615 = vmatprep.mubr.f32.mxu0 0.0
  %616 = vmatmul.mubr.f32.gmra.mxu0 %v497
  %v617 = vpop.f32.mrf.mxu0
  %v618 = vadd.f32 0.0, %v617
  %v619 = vpop.f32.mrf.mxu0
  %620 = vmatprep.mubr.f32.mxu0 0.0
  %621 = vmatmul.mubr.f32.gmra.mxu0 %v498
  %v622 = vpop.f32.mrf.mxu0
  %v623 = vadd.f32 0.0, %v622
  %v624 = vpop.f32.mrf.mxu0
  %625 = vmatprep.mubr.f32.mxu0 0.0
  %626 = vmatmul.mubr.f32.gmra.mxu0 %v499
  %v627 = vpop.f32.mrf.mxu0
  %v628 = vadd.f32 0.0, %v627
  %v629 = vpop.f32.mrf.mxu0
  %630 = vdwg.mxu0
  %631 = vmatprep.subr.mxu0 0.0
  %632 = vmatpush1.msra.mxu0 %v528
  %633 = vmatprep.subr.mxu0 0.0
  %634 = vmatpush1.msra.mxu0 %v527
  %635 = vmatprep.subr.mxu0 0.0
  %636 = vmatpush1.msra.mxu0 %v526
  %637 = vmatprep.subr.mxu0 0.0
  %638 = vmatpush1.msra.mxu0 %v525
  %639 = vmatprep.subr.mxu0 0.0
  %640 = vmatpush1.msra.mxu0 %v524
  %641 = vmatprep.subr.mxu0 0.0
  %642 = vmatpush1.msra.mxu0 %v523
  %643 = vmatprep.subr.mxu0 0.0
  %644 = vmatpush1.msra.mxu0 %v522
  %645 = vmatprep.subr.mxu0 0.0
  %646 = vmatpush1.msra.mxu0 %v521
  %647 = vmatprep.subr.mxu0 0.0
  %648 = vmatpush1.msra.mxu0 %v520
  %649 = vmatprep.subr.mxu0 0.0
  %650 = vmatpush1.msra.mxu0 %v519
  %651 = vmatprep.subr.mxu0 0.0
  %652 = vmatpush1.msra.mxu0 %v518
  %653 = vmatprep.subr.mxu0 0.0
  %654 = vmatpush1.msra.mxu0 %v517
  %655 = vmatprep.subr.mxu0 0.0
  %656 = vmatpush1.msra.mxu0 %v516
  %657 = vmatprep.subr.mxu0 0.0
  %658 = vmatpush1.msra.mxu0 %v515
  %659 = vmatprep.subr.mxu0 0.0
  %660 = vmatpush1.msra.mxu0 %v514
  %661 = vmatprep.subr.mxu0 0.0
  %662 = vmatpush1.msra.mxu0 %v513
  %663 = vmatprep.subr.mxu0 0.0
  %664 = vmatpush2.msra.mxu0 0.0
  %665 = vmatprep.subr.mxu0 0.0
  %666 = vmatpush2.msra.mxu0 0.0
  %667 = vmatprep.subr.mxu0 0.0
  %668 = vmatpush2.msra.mxu0 0.0
  %669 = vmatprep.subr.mxu0 0.0
  %670 = vmatpush2.msra.mxu0 0.0
  %671 = vmatprep.subr.mxu0 0.0
  %672 = vmatpush2.msra.mxu0 0.0
  %673 = vmatprep.subr.mxu0 0.0
  %674 = vmatpush2.msra.mxu0 0.0
  %675 = vmatprep.subr.mxu0 0.0
  %676 = vmatpush2.msra.mxu0 0.0
  %677 = vmatprep.subr.mxu0 0.0
  %678 = vmatpush2.msra.mxu0 0.0
  %679 = vmatprep.subr.mxu0 0.0
  %680 = vmatpush2.msra.mxu0 0.0
  %681 = vmatprep.subr.mxu0 0.0
  %682 = vmatpush2.msra.mxu0 0.0
  %683 = vmatprep.subr.mxu0 0.0
  %684 = vmatpush2.msra.mxu0 0.0
  %685 = vmatprep.subr.mxu0 0.0
  %686 = vmatpush2.msra.mxu0 0.0
  %687 = vmatprep.subr.mxu0 0.0
  %688 = vmatpush2.msra.mxu0 0.0
  %689 = vmatprep.subr.mxu0 0.0
  %690 = vmatpush2.msra.mxu0 0.0
  %691 = vmatprep.subr.mxu0 0.0
  %692 = vmatpush2.msra.mxu0 0.0
  %693 = vmatprep.subr.mxu0 0.0
  %694 = vmatpush2.msra.mxu0 0.0
  %695 = vmatprep.mubr.f32.mxu0 0.0
  %696 = vmatmul.mubr.f32.gmra.mxu0 %v509
  %v697 = vpop.f32.mrf.mxu0
  %v698 = vadd.f32 %v613, %v697
  %v699 = vpop.f32.mrf.mxu0
  %700 = vmatprep.mubr.f32.mxu0 0.0
  %701 = vmatmul.mubr.f32.gmra.mxu0 %v510
  %v702 = vpop.f32.mrf.mxu0
  %v703 = vadd.f32 %v618, %v702
  %v704 = vpop.f32.mrf.mxu0
  %705 = vmatprep.mubr.f32.mxu0 0.0
  %706 = vmatmul.mubr.f32.gmra.mxu0 %v511
  %v707 = vpop.f32.mrf.mxu0
  %v708 = vadd.f32 %v623, %v707
  %v709 = vpop.f32.mrf.mxu0
  %710 = vmatprep.mubr.f32.mxu0 0.0
  %711 = vmatmul.mubr.f32.gmra.mxu0 %v512
  %v712 = vpop.f32.mrf.mxu0
  %v713 = vadd.f32 %v628, %v712
  %v714 = vpop.f32.mrf.mxu0
  %715 = vdwg.mxu0
  %v716 = vrot.slane %v496, 1
  %v717 = vrot.slane %v497, 1
  %v718 = vrot.slane %v498, 1
  %v719 = vrot.slane %v499, 1
  %v720 = vsel %vm327, %v718, %v719
  %v721 = vsel %vm327, %v717, %v718
  %v722 = vsel %vm327, %v716, %v717
  %v723 = vsel %vm327, %v719, %v716
  %v724 = vsel %vm83, 0.0, %v722
  %v725 = vsel %vm84, 0.0, %v721
  %v726 = vsel %vm85, 0.0, %v720
  %v727 = vsel %vm86, 0.0, %v723
  %s728 = scalar_lea.vmem %s2, 256
  %v729 = vld [vmem:[%s728] sm:$0xff]
  %v730 = vld [vmem:[%s728 + $0x8] sm:$0xff]
  %v731 = vld [vmem:[%s728 + $0x10] sm:$0xff]
  %v732 = vld [vmem:[%s728 + $0x18] sm:$0xff]
  %v733 = vld [vmem:[%s728 + $0x20] sm:$0xff]
  %v734 = vld [vmem:[%s728 + $0x28] sm:$0xff]
  %v735 = vld [vmem:[%s728 + $0x30] sm:$0xff]
  %v736 = vld [vmem:[%s728 + $0x38] sm:$0xff]
  %v737 = vld [vmem:[%s728 + $0x40] sm:$0xff]
  %v738 = vld [vmem:[%s728 + $0x48] sm:$0xff]
  %v739 = vld [vmem:[%s728 + $0x50] sm:$0xff]
  %v740 = vld [vmem:[%s728 + $0x58] sm:$0xff]
  %v741 = vld [vmem:[%s728 + $0x60] sm:$0xff]
  %v742 = vld [vmem:[%s728 + $0x68] sm:$0xff]
  %v743 = vld [vmem:[%s728 + $0x70] sm:$0xff]
  %v744 = vld [vmem:[%s728 + $0x78] sm:$0xff]
  %745 = vmatprep.subr.mxu0 0.0
  %746 = vmatpush1.msra.mxu0 %v744
  %747 = vmatprep.subr.mxu0 0.0
  %748 = vmatpush1.msra.mxu0 %v743
  %749 = vmatprep.subr.mxu0 0.0
  %750 = vmatpush1.msra.mxu0 %v742
  %751 = vmatprep.subr.mxu0 0.0
  %752 = vmatpush1.msra.mxu0 %v741
  %753 = vmatprep.subr.mxu0 0.0
  %754 = vmatpush1.msra.mxu0 %v740
  %755 = vmatprep.subr.mxu0 0.0
  %756 = vmatpush1.msra.mxu0 %v739
  %757 = vmatprep.subr.mxu0 0.0
  %758 = vmatpush1.msra.mxu0 %v738
  %759 = vmatprep.subr.mxu0 0.0
  %760 = vmatpush1.msra.mxu0 %v737
  %761 = vmatprep.subr.mxu0 0.0
  %762 = vmatpush1.msra.mxu0 %v736
  %763 = vmatprep.subr.mxu0 0.0
  %764 = vmatpush1.msra.mxu0 %v735
  %765 = vmatprep.subr.mxu0 0.0
  %766 = vmatpush1.msra.mxu0 %v734
  %767 = vmatprep.subr.mxu0 0.0
  %768 = vmatpush1.msra.mxu0 %v733
  %769 = vmatprep.subr.mxu0 0.0
  %770 = vmatpush1.msra.mxu0 %v732
  %771 = vmatprep.subr.mxu0 0.0
  %772 = vmatpush1.msra.mxu0 %v731
  %773 = vmatprep.subr.mxu0 0.0
  %774 = vmatpush1.msra.mxu0 %v730
  %775 = vmatprep.subr.mxu0 0.0
  %776 = vmatpush1.msra.mxu0 %v729
  %777 = vmatprep.subr.mxu0 0.0
  %778 = vmatpush2.msra.mxu0 0.0
  %779 = vmatprep.subr.mxu0 0.0
  %780 = vmatpush2.msra.mxu0 0.0
  %781 = vmatprep.subr.mxu0 0.0
  %782 = vmatpush2.msra.mxu0 0.0
  %783 = vmatprep.subr.mxu0 0.0
  %784 = vmatpush2.msra.mxu0 0.0
  %785 = vmatprep.subr.mxu0 0.0
  %786 = vmatpush2.msra.mxu0 0.0
  %787 = vmatprep.subr.mxu0 0.0
  %788 = vmatpush2.msra.mxu0 0.0
  %789 = vmatprep.subr.mxu0 0.0
  %790 = vmatpush2.msra.mxu0 0.0
  %791 = vmatprep.subr.mxu0 0.0
  %792 = vmatpush2.msra.mxu0 0.0
  %793 = vmatprep.subr.mxu0 0.0
  %794 = vmatpush2.msra.mxu0 0.0
  %795 = vmatprep.subr.mxu0 0.0
  %796 = vmatpush2.msra.mxu0 0.0
  %797 = vmatprep.subr.mxu0 0.0
  %798 = vmatpush2.msra.mxu0 0.0
  %799 = vmatprep.subr.mxu0 0.0
  %800 = vmatpush2.msra.mxu0 0.0
  %801 = vmatprep.subr.mxu0 0.0
  %802 = vmatpush2.msra.mxu0 0.0
  %803 = vmatprep.subr.mxu0 0.0
  %804 = vmatpush2.msra.mxu0 0.0
  %805 = vmatprep.subr.mxu0 0.0
  %806 = vmatpush2.msra.mxu0 0.0
  %807 = vmatprep.subr.mxu0 0.0
  %808 = vmatpush2.msra.mxu0 0.0
  %809 = vmatprep.mubr.f32.mxu0 0.0
  %810 = vmatmul.mubr.f32.gmra.mxu0 %v724
  %v811 = vpop.f32.mrf.mxu0
  %v812 = vadd.f32 0.0, %v811
  %v813 = vpop.f32.mrf.mxu0
  %814 = vmatprep.mubr.f32.mxu0 0.0
  %815 = vmatmul.mubr.f32.gmra.mxu0 %v725
  %v816 = vpop.f32.mrf.mxu0
  %v817 = vadd.f32 0.0, %v816
  %v818 = vpop.f32.mrf.mxu0
  %819 = vmatprep.mubr.f32.mxu0 0.0
  %820 = vmatmul.mubr.f32.gmra.mxu0 %v726
  %v821 = vpop.f32.mrf.mxu0
  %v822 = vadd.f32 0.0, %v821
  %v823 = vpop.f32.mrf.mxu0
  %824 = vmatprep.mubr.f32.mxu0 0.0
  %825 = vmatmul.mubr.f32.gmra.mxu0 %v727
  %v826 = vpop.f32.mrf.mxu0
  %v827 = vadd.f32 0.0, %v826
  %v828 = vpop.f32.mrf.mxu0
  %829 = vdwg.mxu0
  %v830 = vadd.f32 %v698, %v812
  %v831 = vadd.f32 %v703, %v817
  %v832 = vadd.f32 %v708, %v822
  %v833 = vadd.f32 %v713, %v827
  %v834 = vadd.f32 %v513, %v530
  %v835 = vadd.f32 %v514, %v531
  %v836 = vadd.f32 %v515, %v532
  %v837 = vadd.f32 %v516, %v533
  %v838 = vadd.f32 %v517, %v534
  %v839 = vadd.f32 %v518, %v535
  %v840 = vadd.f32 %v519, %v536
  %v841 = vadd.f32 %v520, %v537
  %v842 = vadd.f32 %v521, %v538
  %v843 = vadd.f32 %v522, %v539
  %v844 = vadd.f32 %v523, %v540
  %v845 = vadd.f32 %v524, %v541
  %v846 = vadd.f32 %v525, %v542
  %v847 = vadd.f32 %v526, %v543
  %v848 = vadd.f32 %v527, %v544
  %v849 = vadd.f32 %v528, %v545
  %v850 = vadd.f32 %v834, %v729
  %v851 = vadd.f32 %v835, %v730
  %v852 = vadd.f32 %v836, %v731
  %v853 = vadd.f32 %v837, %v732
  %v854 = vadd.f32 %v838, %v733
  %v855 = vadd.f32 %v839, %v734
  %v856 = vadd.f32 %v840, %v735
  %v857 = vadd.f32 %v841, %v736
  %v858 = vadd.f32 %v842, %v737
  %v859 = vadd.f32 %v843, %v738
  %v860 = vadd.f32 %v844, %v739
  %v861 = vadd.f32 %v845, %v740
  %v862 = vadd.f32 %v846, %v741
  %v863 = vadd.f32 %v847, %v742
  %v864 = vadd.f32 %v848, %v743
  %v865 = vadd.f32 %v849, %v744
  %866 = vmatprep.subr.mxu0 0.0
  %867 = vmatpush1.msra.mxu0 %v865
  %868 = vmatprep.subr.mxu0 0.0
  %869 = vmatpush1.msra.mxu0 %v864
  %870 = vmatprep.subr.mxu0 0.0
  %871 = vmatpush1.msra.mxu0 %v863
  %872 = vmatprep.subr.mxu0 0.0
  %873 = vmatpush1.msra.mxu0 %v862
  %874 = vmatprep.subr.mxu0 0.0
  %875 = vmatpush1.msra.mxu0 %v861
  %876 = vmatprep.subr.mxu0 0.0
  %877 = vmatpush1.msra.mxu0 %v860
  %878 = vmatprep.subr.mxu0 0.0
  %879 = vmatpush1.msra.mxu0 %v859
  %880 = vmatprep.subr.mxu0 0.0
  %881 = vmatpush1.msra.mxu0 %v858
  %882 = vmatprep.subr.mxu0 0.0
  %883 = vmatpush1.msra.mxu0 %v857
  %884 = vmatprep.subr.mxu0 0.0
  %885 = vmatpush1.msra.mxu0 %v856
  %886 = vmatprep.subr.mxu0 0.0
  %887 = vmatpush1.msra.mxu0 %v855
  %888 = vmatprep.subr.mxu0 0.0
  %889 = vmatpush1.msra.mxu0 %v854
  %890 = vmatprep.subr.mxu0 0.0
  %891 = vmatpush1.msra.mxu0 %v853
  %892 = vmatprep.subr.mxu0 0.0
  %893 = vmatpush1.msra.mxu0 %v852
  %894 = vmatprep.subr.mxu0 0.0
  %895 = vmatpush1.msra.mxu0 %v851
  %896 = vmatprep.subr.mxu0 0.0
  %897 = vmatpush1.msra.mxu0 %v850
  %898 = vmatprep.subr.mxu0 0.0
  %899 = vmatpush2.msra.mxu0 0.0
  %900 = vmatprep.subr.mxu0 0.0
  %901 = vmatpush2.msra.mxu0 0.0
  %902 = vmatprep.subr.mxu0 0.0
  %903 = vmatpush2.msra.mxu0 0.0
  %904 = vmatprep.subr.mxu0 0.0
  %905 = vmatpush2.msra.mxu0 0.0
  %906 = vmatprep.subr.mxu0 0.0
  %907 = vmatpush2.msra.mxu0 0.0
  %908 = vmatprep.subr.mxu0 0.0
  %909 = vmatpush2.msra.mxu0 0.0
  %910 = vmatprep.subr.mxu0 0.0
  %911 = vmatpush2.msra.mxu0 0.0
  %912 = vmatprep.subr.mxu0 0.0
  %913 = vmatpush2.msra.mxu0 0.0
  %914 = vmatprep.subr.mxu0 0.0
  %915 = vmatpush2.msra.mxu0 0.0
  %916 = vmatprep.subr.mxu0 0.0
  %917 = vmatpush2.msra.mxu0 0.0
  %918 = vmatprep.subr.mxu0 0.0
  %919 = vmatpush2.msra.mxu0 0.0
  %920 = vmatprep.subr.mxu0 0.0
  %921 = vmatpush2.msra.mxu0 0.0
  %922 = vmatprep.subr.mxu0 0.0
  %923 = vmatpush2.msra.mxu0 0.0
  %924 = vmatprep.subr.mxu0 0.0
  %925 = vmatpush2.msra.mxu0 0.0
  %926 = vmatprep.subr.mxu0 0.0
  %927 = vmatpush2.msra.mxu0 0.0
  %928 = vmatprep.subr.mxu0 0.0
  %929 = vmatpush2.msra.mxu0 0.0
  %930 = vmatprep.mubr.f32.mxu0 0.0
  %931 = vmatmul.mubr.f32.gmra.mxu0 %v500
  %v932 = vpop.f32.mrf.mxu0
  %v933 = vadd.f32 0.0, %v932
  %v934 = vpop.f32.mrf.mxu0
  %935 = vdwg.mxu0
  %936 = vmatprep.subr.mxu0 0.0
  %937 = vmatpush1.msra.mxu0 %v528
  %938 = vmatprep.subr.mxu0 0.0
  %939 = vmatpush1.msra.mxu0 %v527
  %940 = vmatprep.subr.mxu0 0.0
  %941 = vmatpush1.msra.mxu0 %v526
  %942 = vmatprep.subr.mxu0 0.0
  %943 = vmatpush1.msra.mxu0 %v525
  %944 = vmatprep.subr.mxu0 0.0
  %945 = vmatpush1.msra.mxu0 %v524
  %946 = vmatprep.subr.mxu0 0.0
  %947 = vmatpush1.msra.mxu0 %v523
  %948 = vmatprep.subr.mxu0 0.0
  %949 = vmatpush1.msra.mxu0 %v522
  %950 = vmatprep.subr.mxu0 0.0
  %951 = vmatpush1.msra.mxu0 %v521
  %952 = vmatprep.subr.mxu0 0.0
  %953 = vmatpush1.msra.mxu0 %v520
  %954 = vmatprep.subr.mxu0 0.0
  %955 = vmatpush1.msra.mxu0 %v519
  %956 = vmatprep.subr.mxu0 0.0
  %957 = vmatpush1.msra.mxu0 %v518
  %958 = vmatprep.subr.mxu0 0.0
  %959 = vmatpush1.msra.mxu0 %v517
  %960 = vmatprep.subr.mxu0 0.0
  %961 = vmatpush1.msra.mxu0 %v516
  %962 = vmatprep.subr.mxu0 0.0
  %963 = vmatpush1.msra.mxu0 %v515
  %964 = vmatprep.subr.mxu0 0.0
  %965 = vmatpush1.msra.mxu0 %v514
  %966 = vmatprep.subr.mxu0 0.0
  %967 = vmatpush1.msra.mxu0 %v513
  %968 = vmatprep.subr.mxu0 0.0
  %969 = vmatpush2.msra.mxu0 0.0
  %970 = vmatprep.subr.mxu0 0.0
  %971 = vmatpush2.msra.mxu0 0.0
  %972 = vmatprep.subr.mxu0 0.0
  %973 = vmatpush2.msra.mxu0 0.0
  %974 = vmatprep.subr.mxu0 0.0
  %975 = vmatpush2.msra.mxu0 0.0
  %976 = vmatprep.subr.mxu0 0.0
  %977 = vmatpush2.msra.mxu0 0.0
  %978 = vmatprep.subr.mxu0 0.0
  %979 = vmatpush2.msra.mxu0 0.0
  %980 = vmatprep.subr.mxu0 0.0
  %981 = vmatpush2.msra.mxu0 0.0
  %982 = vmatprep.subr.mxu0 0.0
  %983 = vmatpush2.msra.mxu0 0.0
  %984 = vmatprep.subr.mxu0 0.0
  %985 = vmatpush2.msra.mxu0 0.0
  %986 = vmatprep.subr.mxu0 0.0
  %987 = vmatpush2.msra.mxu0 0.0
  %988 = vmatprep.subr.mxu0 0.0
  %989 = vmatpush2.msra.mxu0 0.0
  %990 = vmatprep.subr.mxu0 0.0
  %991 = vmatpush2.msra.mxu0 0.0
  %992 = vmatprep.subr.mxu0 0.0
  %993 = vmatpush2.msra.mxu0 0.0
  %994 = vmatprep.subr.mxu0 0.0
  %995 = vmatpush2.msra.mxu0 0.0
  %996 = vmatprep.subr.mxu0 0.0
  %997 = vmatpush2.msra.mxu0 0.0
  %998 = vmatprep.subr.mxu0 0.0
  %999 = vmatpush2.msra.mxu0 0.0
  %1000 = vmatprep.mubr.f32.mxu0 0.0
  %1001 = vmatmul.mubr.f32.gmra.mxu0 %v500
  %v1002 = vpop.f32.mrf.mxu0
  %v1003 = vadd.f32 0.0, %v1002
  %v1004 = vpop.f32.mrf.mxu0
  %1005 = vdwg.mxu0
  %1006 = vmatprep.subr.mxu0 0.0
  %1007 = vmatpush1.msra.mxu0 %v744
  %1008 = vmatprep.subr.mxu0 0.0
  %1009 = vmatpush1.msra.mxu0 %v743
  %1010 = vmatprep.subr.mxu0 0.0
  %1011 = vmatpush1.msra.mxu0 %v742
  %1012 = vmatprep.subr.mxu0 0.0
  %1013 = vmatpush1.msra.mxu0 %v741
  %1014 = vmatprep.subr.mxu0 0.0
  %1015 = vmatpush1.msra.mxu0 %v740
  %1016 = vmatprep.subr.mxu0 0.0
  %1017 = vmatpush1.msra.mxu0 %v739
  %1018 = vmatprep.subr.mxu0 0.0
  %1019 = vmatpush1.msra.mxu0 %v738
  %1020 = vmatprep.subr.mxu0 0.0
  %1021 = vmatpush1.msra.mxu0 %v737
  %1022 = vmatprep.subr.mxu0 0.0
  %1023 = vmatpush1.msra.mxu0 %v736
  %1024 = vmatprep.subr.mxu0 0.0
  %1025 = vmatpush1.msra.mxu0 %v735
  %1026 = vmatprep.subr.mxu0 0.0
  %1027 = vmatpush1.msra.mxu0 %v734
  %1028 = vmatprep.subr.mxu0 0.0
  %1029 = vmatpush1.msra.mxu0 %v733
  %1030 = vmatprep.subr.mxu0 0.0
  %1031 = vmatpush1.msra.mxu0 %v732
  %1032 = vmatprep.subr.mxu0 0.0
  %1033 = vmatpush1.msra.mxu0 %v731
  %1034 = vmatprep.subr.mxu0 0.0
  %1035 = vmatpush1.msra.mxu0 %v730
  %1036 = vmatprep.subr.mxu0 0.0
  %1037 = vmatpush1.msra.mxu0 %v729
  %1038 = vmatprep.subr.mxu0 0.0
  %1039 = vmatpush2.msra.mxu0 0.0
  %1040 = vmatprep.subr.mxu0 0.0
  %1041 = vmatpush2.msra.mxu0 0.0
  %1042 = vmatprep.subr.mxu0 0.0
  %1043 = vmatpush2.msra.mxu0 0.0
  %1044 = vmatprep.subr.mxu0 0.0
  %1045 = vmatpush2.msra.mxu0 0.0
  %1046 = vmatprep.subr.mxu0 0.0
  %1047 = vmatpush2.msra.mxu0 0.0
  %1048 = vmatprep.subr.mxu0 0.0
  %1049 = vmatpush2.msra.mxu0 0.0
  %1050 = vmatprep.subr.mxu0 0.0
  %1051 = vmatpush2.msra.mxu0 0.0
  %1052 = vmatprep.subr.mxu0 0.0
  %1053 = vmatpush2.msra.mxu0 0.0
  %1054 = vmatprep.subr.mxu0 0.0
  %1055 = vmatpush2.msra.mxu0 0.0
  %1056 = vmatprep.subr.mxu0 0.0
  %1057 = vmatpush2.msra.mxu0 0.0
  %1058 = vmatprep.subr.mxu0 0.0
  %1059 = vmatpush2.msra.mxu0 0.0
  %1060 = vmatprep.subr.mxu0 0.0
  %1061 = vmatpush2.msra.mxu0 0.0
  %1062 = vmatprep.subr.mxu0 0.0
  %1063 = vmatpush2.msra.mxu0 0.0
  %1064 = vmatprep.subr.mxu0 0.0
  %1065 = vmatpush2.msra.mxu0 0.0
  %1066 = vmatprep.subr.mxu0 0.0
  %1067 = vmatpush2.msra.mxu0 0.0
  %1068 = vmatprep.subr.mxu0 0.0
  %1069 = vmatpush2.msra.mxu0 0.0
  %1070 = vmatprep.mubr.f32.mxu0 0.0
  %1071 = vmatmul.mubr.f32.gmra.mxu0 %v500
  %v1072 = vpop.f32.mrf.mxu0
  %v1073 = vadd.f32 0.0, %v1072
  %v1074 = vpop.f32.mrf.mxu0
  %1075 = vdwg.mxu0
  %v1076 = vlaneseq
  %v1077 = vshrl.u32 %v1076, 7
  %v1078 = vsub.s32 0, %v1077
  %v1079 = vrot.slane %v1003, %v1078
  %v1080 = vmul.f32 %v91, %v1079
  %v1081 = vmul.f32 %v92, %v1079
  %v1082 = vmul.f32 %v93, %v1079
  %v1083 = vmul.f32 %v94, %v1079
  %v1084 = vlaneseq
  %v1085 = vshrl.u32 %v1084, 7
  %v1086 = vsub.s32 0, %v1085
  %v1087 = vrot.slane %v933, %v1086
  %v1088 = vsub.f32 %v1087, %v1080
  %v1089 = vsub.f32 %v1087, %v1081
  %v1090 = vsub.f32 %v1087, %v1082
  %v1091 = vsub.f32 %v1087, %v1083
  %v1092 = vlaneseq
  %v1093 = vshrl.u32 %v1092, 7
  %v1094 = vsub.s32 0, %v1093
  %v1095 = vrot.slane %v1073, %v1094
  %v1096 = vmul.f32 %v99, %v1095
  %v1097 = vmul.f32 %v100, %v1095
  %v1098 = vmul.f32 %v101, %v1095
  %v1099 = vmul.f32 %v102, %v1095
  %v1100 = vsub.f32 %v1088, %v1096
  %v1101 = vsub.f32 %v1089, %v1097
  %v1102 = vsub.f32 %v1090, %v1098
  %v1103 = vsub.f32 %v1091, %v1099
  %v1104 = vadd.f32 %v830, %v831
  %v1105 = vadd.f32 %v1104, %v832
  %v1106 = vadd.f32 %v1105, %v833
  %v1107 = vrot.slane %v1106, 4
  %v1108 = vadd.f32 %v1106, %v1107
  %v1109 = vrot.slane %v1108, 2
  %v1110 = vadd.f32 %v1108, %v1109
  %v1111 = vrot.slane %v1110, 1
  %v1112 = vadd.f32 %v1110, %v1111
  %v1113 = vadd.f32 %v1100, %v1101
  %v1114 = vadd.f32 %v1113, %v1102
  %v1115 = vadd.f32 %v1114, %v1103
  %v1116 = vrot.slane %v1115, 4
  %v1117 = vadd.f32 %v1115, %v1116
  %v1118 = vrot.slane %v1117, 2
  %v1119 = vadd.f32 %v1117, %v1118
  %v1120 = vrot.slane %v1119, 1
  %v1121 = vadd.f32 %v1119, %v1120
  %v1122 = vmul.f32 %v1121, 2.0
  %v1123 = vadd.f32 %v1112, %v1122
  %v1124 = vmul.f32 %v830, %v830
  %v1125 = vmul.f32 %v831, %v831
  %v1126 = vmul.f32 %v832, %v832
  %v1127 = vmul.f32 %v833, %v833
  %v1128 = vadd.f32 %v1124, %v1125
  %v1129 = vadd.f32 %v1128, %v1126
  %v1130 = vadd.f32 %v1129, %v1127
  %v1131 = vrot.slane %v1130, 4
  %v1132 = vadd.f32 %v1130, %v1131
  %v1133 = vrot.slane %v1132, 2
  %v1134 = vadd.f32 %v1132, %v1133
  %v1135 = vrot.slane %v1134, 1
  %v1136 = vadd.f32 %v1134, %v1135
  %v1137 = vmul.f32 %v1100, %v1100
  %v1138 = vmul.f32 %v1101, %v1101
  %v1139 = vmul.f32 %v1102, %v1102
  %v1140 = vmul.f32 %v1103, %v1103
  %v1141 = vadd.f32 %v1137, %v1138
  %v1142 = vadd.f32 %v1141, %v1139
  %v1143 = vadd.f32 %v1142, %v1140
  %v1144 = vrot.slane %v1143, 4
  %v1145 = vadd.f32 %v1143, %v1144
  %v1146 = vrot.slane %v1145, 2
  %v1147 = vadd.f32 %v1145, %v1146
  %v1148 = vrot.slane %v1147, 1
  %v1149 = vadd.f32 %v1147, %v1148
  %v1150 = vmul.f32 %v1149, 2.0
  %v1151 = vadd.f32 %v1136, %v1150
  %v1152 = vld [vmem:[%s5] sm:$0x1]
  %v1153 = vld [vmem:[%s6] sm:$0x1]
  %v1154 = vmul.f32 %v1123, 0.00625
  %v1155 = vmul.f32 %v1151, 0.00625
  %v1156 = vmul.f32 %v1154, %v1154
  %v1157 = vsub.f32 %v1155, %v1156
  %v1158 = vmax.f32 %v1157, 0.0
  %v1159 = vadd.f32 %v1158, 1e-05
  %v1160 = vrsqrt.pop %v1159
  %v1161 = vmul.f32 %v1152, %v1160
  %v1162 = vmul.f32 %v1154, %v1161
  %v1163 = vsub.f32 %v1153, %v1162
  %v1165 = vlaneseq
  %v1166 = vshrl.u32 %v1165, 7
  %v1167 = vsub.s32 0, %v1166
  %v1168 = vrot.slane %v1163, %v1167
  %v1170 = vadd.f32 %v1168, %v103
  %v1171 = vadd.f32 %v1168, %v104
  %v1172 = vadd.f32 %v1168, %v105
  %v1173 = vadd.f32 %v1168, %v106
  %v1174 = vmax.f32 %v1170, 0.0
  %v1175 = vmax.f32 %v1171, 0.0
  %v1176 = vmax.f32 %v1172, 0.0
  %v1177 = vmax.f32 %v1173, 0.0
  %v1179 = vlaneseq
  %v1180 = vshrl.u32 %v1179, 7
  %v1181 = vsub.s32 0, %v1180
  %v1182 = vrot.slane %v1161, %v1181
  %v1184 = vmul.f32 %v1100, %v1182
  %v1185 = vmul.f32 %v1101, %v1182
  %v1186 = vmul.f32 %v1102, %v1182
  %v1187 = vmul.f32 %v1103, %v1182
  %v1188 = vadd.f32 %v1184, %v1168
  %v1189 = vadd.f32 %v1185, %v1168
  %v1190 = vadd.f32 %v1186, %v1168
  %v1191 = vadd.f32 %v1187, %v1168
  %v1192 = vadd.f32 %v1188, %v103
  %v1193 = vadd.f32 %v1189, %v104
  %v1194 = vadd.f32 %v1190, %v105
  %v1195 = vadd.f32 %v1191, %v106
  %v1196 = vmax.f32 %v1192, 0.0
  %v1197 = vmax.f32 %v1193, 0.0
  %v1198 = vmax.f32 %v1194, 0.0
  %v1199 = vmax.f32 %v1195, 0.0
  %v1200 = vmul.f32 %v830, %v1182
  %v1201 = vmul.f32 %v831, %v1182
  %v1202 = vmul.f32 %v832, %v1182
  %v1203 = vmul.f32 %v833, %v1182
  %v1204 = vadd.f32 %v1200, %v1168
  %v1205 = vadd.f32 %v1201, %v1168
  %v1206 = vadd.f32 %v1202, %v1168
  %v1207 = vadd.f32 %v1203, %v1168
  %v1208 = vadd.f32 %v1204, %v103
  %v1209 = vadd.f32 %v1205, %v104
  %v1210 = vadd.f32 %v1206, %v105
  %v1211 = vadd.f32 %v1207, %v106
  %v1212 = vmax.f32 %v1208, 0.0
  %v1213 = vmax.f32 %v1209, 0.0
  %v1214 = vmax.f32 %v1210, 0.0
  %v1215 = vmax.f32 %v1211, 0.0
  %1216 = vst [vmem:[%s7] sm:$0xff] %v1174
  %1217 = vst [vmem:[%s7 + $0x18] sm:$0xff] %v1175
  %1218 = vst [vmem:[%s7 + $0x30] sm:$0xff] %v1176
  %1219 = vst [vmem:[%s7 + $0x48] sm:$0xff] %v1177
  %1220 = vst [vmem:[%s7 + $0x8] sm:$0xff] %v1196
  %1221 = vst [vmem:[%s7 + $0x20] sm:$0xff] %v1197
  %1222 = vst [vmem:[%s7 + $0x38] sm:$0xff] %v1198
  %1223 = vst [vmem:[%s7 + $0x50] sm:$0xff] %v1199
  %1224 = vst [vmem:[%s7 + $0x10] sm:$0xff] %v1212
  %1225 = vst [vmem:[%s7 + $0x28] sm:$0xff] %v1213
  %1226 = vst [vmem:[%s7 + $0x40] sm:$0xff] %v1214
  %1227 = vst [vmem:[%s7 + $0x58] sm:$0xff] %v1215
  // Predicated region
  $region30: #{basic_block_forward.1} parent=0 // pred_check
    _
  $region31: #{basic_block_forward.1} parent=0 // pred_check_branch
    %1229 = sbr.rel (0) target = $region33
  $region32: #{basic_block_forward.1} parent=0 // pred_region
    _
  $region33: #{basic_block_forward.1} parent=0 // pred_fallthru
    _
  // Predicated region
  $region34: #{basic_block_forward.1} parent=0 // pred_check
    _
  $region35: #{basic_block_forward.1} parent=0 // pred_check_branch
    %1231 = sbr.rel (0) target = $region37
  $region36: #{basic_block_forward.1} parent=0 // pred_region
    _
  $region37: #{basic_block_forward.1} parent=0 // pred_fallthru
    _

</llo_original>
